<compile_context>
chip_gen: v5e
topology: v5e:2x2
jax: 0.10.0
libtpu: 0.0.40
codegen_flags: <defaults>
</compile_context>

<pallas_src>
import jax
import jax.numpy as jnp
from jax.experimental import pallas as pl
from jax.experimental.pallas import tpu as pltpu


def _convlstm_gates_kernel(wt_ref, b_ref, p_ref, c_ref, h_out_ref, c_out_ref):
    # wt_ref : (Cout, K)  bf16  conv weights, rows ordered [i, f, o, g] blocks of HID
    # b_ref  : (Cout, 1)  f32   conv bias (broadcast over lanes / spatial)
    # p_ref  : (K, TM)    bf16  transposed im2col patches (channels x spatial)
    # c_ref  : (HID, TM)  f32   previous cell state
    # h_out_ref, c_out_ref : (HID, TM) f32
    HID = c_ref.shape[0]

    # Single large-K matmul on the MXU, f32 accumulation.
    acc = jnp.dot(wt_ref[...], p_ref[...], preferred_element_type=jnp.float32)
    acc = acc + b_ref[...]                         # (Cout, TM), lane broadcast

    # Gate order matches torch.split: i, f, o, g (sublane slices, lane-dense).
    cc_i = acc[0 * HID:1 * HID, :]
    cc_f = acc[1 * HID:2 * HID, :]
    cc_o = acc[2 * HID:3 * HID, :]
    cc_g = acc[3 * HID:4 * HID, :]

    c_cur = c_ref[...]
    i = jax.nn.sigmoid(cc_i)                       # peephole weights are zero at init
    f = jax.nn.sigmoid(cc_f)
    g = jnp.tanh(cc_g)
    c_next = f * c_cur + i * g
    o = jax.nn.sigmoid(cc_o)
    h_next = o * jnp.tanh(c_next)

    h_out_ref[...] = h_next
    c_out_ref[...] = c_next


def convlstm_layer_pallas(cur_cf, h_cf, c_cf, prm, *, tm=512):
    """One ConvLSTMLayer step over B frames.

    cur_cf : (Cx,  B, H, W) f32  layer input, channel-first
    h_cf   : (HID, B, H, W) f32  previous hidden state, channel-first
    c_cf   : (HID, B, H, W) f32  previous cell state, channel-first
    Returns (h_next_cf, c_next_cf), both (HID, B, H, W) f32.
    """
    Cx, B, H, W = cur_cf.shape
    HID = prm["hid"]
    KH, KW = prm["ks"]
    ph, pw = (KH - 1) // 2, (KW - 1) // 2
    Cin = Cx + HID
    K = KH * KW * Cin
    Cout = 4 * HID
    M = B * H * W

    # Transposed im2col (channel-first): builds one lane-dense (K, M) operand.
    xh = jnp.concatenate([cur_cf, h_cf], axis=0)                    # (Cin, B, H, W)
    xh = jnp.pad(xh, ((0, 0), (0, 0), (ph, ph), (pw, pw)))          # (Cin, B, Hp, Wp)
    patches = [xh[:, :, ky:ky + H, kx:kx + W].reshape(Cin, M)
               for ky in range(KH) for kx in range(KW)]
    p_t = jnp.concatenate(patches, axis=0).astype(jnp.bfloat16)     # (K, M)
    c_flat = c_cf.reshape(HID, M)                                   # (HID, M)

    # Tile the spatial/batch axis; pad to a multiple of the tile.
    tm = min(tm, M)
    m_pad = pl.cdiv(M, tm) * tm
    if m_pad != M:
        p_t = jnp.pad(p_t, ((0, 0), (0, m_pad - M)))
        c_flat = jnp.pad(c_flat, ((0, 0), (0, m_pad - M)))

    grid = (m_pad // tm,)

    h_flat, c_next_flat = pl.pallas_call(
        _convlstm_gates_kernel,
        out_shape=(jax.ShapeDtypeStruct((HID, m_pad), jnp.float32),
                   jax.ShapeDtypeStruct((HID, m_pad), jnp.float32)),
        grid=grid,
        in_specs=[
            pl.BlockSpec((Cout, K), lambda m: (0, 0)),      # weights, resident
            pl.BlockSpec((Cout, 1), lambda m: (0, 0)),      # bias, resident
            pl.BlockSpec((K, tm), lambda m: (0, m)),        # im2col patches tile
            pl.BlockSpec((HID, tm), lambda m: (0, m)),      # c_prev tile
        ],
        out_specs=[
            pl.BlockSpec((HID, tm), lambda m: (0, m)),
            pl.BlockSpec((HID, tm), lambda m: (0, m)),
        ],
        compiler_params=pltpu.CompilerParams(
            dimension_semantics=("parallel",),
            vmem_limit_bytes=32 * 1024 * 1024),
    )(prm["w_t"], prm["b_col"], p_t, c_flat)

    h_next = h_flat[:, :M].reshape(HID, B, H, W)
    c_next = c_next_flat[:, :M].reshape(HID, B, H, W)
    return h_next, c_next


def init_layer_params(key, in_channels, hidden_channels, kernel_size):
    """Deterministic init mirroring ConvLSTMLayer.__init__ / initialize_weights."""
    kh, kw = kernel_size
    cin = in_channels + hidden_channels
    cout = 4 * hidden_channels
    k_w, k_b = jax.random.split(key)
    fan_in = cin * kh * kw
    fan_out = cout * kh * kw
    std = (2.0 / (fan_in + fan_out)) ** 0.5                 # xavier_normal_
    w_oihw = std * jax.random.normal(k_w, (cout, cin, kh, kw), jnp.float32)
    w_hwio = jnp.transpose(w_oihw, (2, 3, 1, 0))            # (kh, kw, cin, cout)
    # (Cout, K) with K ordered (ky, kx, cin) to match the im2col operand.
    w_t = jnp.transpose(w_hwio.reshape(kh * kw * cin, cout), (1, 0))
    bias = jax.random.uniform(k_b, (cout,), jnp.float32)    # uniform_(0, 1)
    return {"w_hwio": w_hwio,
            "w_t": w_t.astype(jnp.bfloat16),
            "b": bias,
            "b_col": bias.reshape(cout, 1),
            "hid": hidden_channels,
            "ks": kernel_size}


def conv_lstm_forward(x, hidden_states, params):
    """Mirrors ConvLSTM.forward.

    x: (b, seq, c, h, w) float32 (PyTorch convention).
    hidden_states: list of (h, c) per layer; entries may be (None, None);
                   non-None states are NCHW (B, hid, H, W).
    Returns (h_last_NCHW, new_hidden_states_NCHW).
    """
    b, seq, c, h, w = x.shape
    B = b * seq
    cur_cf = jnp.transpose(x.reshape(B, c, h, w), (1, 0, 2, 3))   # (C, B, H, W)
    new_states = list(hidden_states)
    ht_nchw = None
    for li, prm in enumerate(params):
        hid = prm["hid"]
        h_prev, c_prev = hidden_states[li]
        if h_prev is None:
            h_cf = jnp.zeros((hid, B, h, w), jnp.float32)
            c_cf = jnp.zeros((hid, B, h, w), jnp.float32)
        else:
            h_cf = jnp.transpose(h_prev, (1, 0, 2, 3))
            c_cf = jnp.transpose(c_prev, (1, 0, 2, 3))
        h_next_cf, c_next_cf = convlstm_layer_pallas(cur_cf, h_cf, c_cf, prm)
        ht_nchw = jnp.transpose(h_next_cf, (1, 0, 2, 3))
        ct_nchw = jnp.transpose(c_next_cf, (1, 0, 2, 3))
        new_states[li] = (ht_nchw, ct_nchw)
        cur_cf = h_next_cf
    return ht_nchw, new_states


def conv_lstm_forward_ref(x, hidden_states, params):
    """Pure-JAX reference (lax conv) for correctness checking.

    Matches kernel numerics: bf16 conv inputs, f32 accumulation, zero peephole.
    """
    b, seq, c, h, w = x.shape
    B = b * seq
    cur = jnp.transpose(x.reshape(B, c, h, w), (0, 2, 3, 1))      # NHWC
    ht_nchw = None
    for li, prm in enumerate(params):
        hid = prm["hid"]
        h_prev, c_prev = hidden_states[li]
        if h_prev is None:
            h_prev = jnp.zeros((B, h, w, hid), jnp.float32)
            c_prev = jnp.zeros((B, h, w, hid), jnp.float32)
        else:
            h_prev = jnp.transpose(h_prev, (0, 2, 3, 1))
            c_prev = jnp.transpose(c_prev, (0, 2, 3, 1))
        kh, kw = prm["ks"]
        ph, pw = (kh - 1) // 2, (kw - 1) // 2
        xh = jnp.concatenate([cur, h_prev], axis=-1)
        conv = jax.lax.conv_general_dilated(
            xh.astype(jnp.bfloat16), prm["w_hwio"].astype(jnp.bfloat16),
            window_strides=(1, 1), padding=[(ph, ph), (pw, pw)],
            dimension_numbers=("NHWC", "HWIO", "NHWC"),
            preferred_element_type=jnp.float32) + prm["b"]
        cc_i = conv[..., 0 * hid:1 * hid]
        cc_f = conv[..., 1 * hid:2 * hid]
        cc_o = conv[..., 2 * hid:3 * hid]
        cc_g = conv[..., 3 * hid:4 * hid]
        i = jax.nn.sigmoid(cc_i)
        f = jax.nn.sigmoid(cc_f)
        g = jnp.tanh(cc_g)
        c_next = f * c_prev + i * g
        o = jax.nn.sigmoid(cc_o)
        h_next = o * jnp.tanh(c_next)
        ht_nchw = jnp.transpose(h_next, (0, 3, 1, 2))
        cur = h_next
    return ht_nchw, hidden_states


if __name__ == "__main__":
    key = jax.random.PRNGKey(0)
    b, seq, in_channels, H, W = 2, 4, 4, 16, 16
    hidden_channels = 32
    kernel_size = (3, 3)
    num_layers = 1

    k_x, k_p = jax.random.split(key)
    x = jax.random.normal(k_x, (b, seq, in_channels, H, W), jnp.float32)

    params = []
    cur_in = in_channels
    for _ in range(num_layers):
        k_p, sub = jax.random.split(k_p)
        params.append(init_layer_params(sub, cur_in, hidden_channels, kernel_size))
        cur_in = hidden_channels

    hidden_states = [(None, None)] * num_layers

    h_last, new_states = conv_lstm_forward(x, hidden_states, params)
    h_last = jax.block_until_ready(h_last)

    # Correctness check against a pure-JAX reference with matching numerics.
    h_ref, _ = conv_lstm_forward_ref(x, [(None, None)] * num_layers, params)
    assert h_last.shape == (b * seq, hidden_channels, H, W)
    assert new_states[0][0].shape == (b * seq, hidden_channels, H, W)
    assert new_states[0][1].shape == (b * seq, hidden_channels, H, W)
    assert jnp.allclose(h_last, h_ref, atol=2e-3, rtol=2e-3)

    print("KERNEL_OK")
</pallas_src>

<mosaic_0001>
module attributes {stable_mosaic.version = 11 : i64} {
  func.func @_convlstm_gates_kernel(%arg0: i32, %arg1: memref<128x324xbf16, #tpu.memory_space<vmem>>, %arg2: memref<128x1xf32, #tpu.memory_space<vmem>>, %arg3: memref<324x512xbf16, #tpu.memory_space<vmem>>, %arg4: memref<32x512xf32, #tpu.memory_space<vmem>>, %arg5: memref<32x512xf32, #tpu.memory_space<vmem>>, %arg6: memref<32x512xf32, #tpu.memory_space<vmem>>) attributes {dimension_semantics = [#tpu.dimension_semantics<parallel>], iteration_bounds = array<i64: 4>, scalar_prefetch = 0 : i64, scratch_operands = 0 : i64, tpu.core_type = #tpu.core_type<tc>, window_params = [{pipeline_mode = #tpu.pipeline_mode<synchronous>, transform_indices = @transform_0, window_bounds = array<i64: 128, 324>}, {pipeline_mode = #tpu.pipeline_mode<synchronous>, transform_indices = @transform_1, window_bounds = array<i64: 128, 1>}, {transform_indices = @transform_2, window_bounds = array<i64: 324, 512>}, {transform_indices = @transform_3, window_bounds = array<i64: 32, 512>}, {transform_indices = @transform_4, window_bounds = array<i64: 32, 512>}, {transform_indices = @transform_5, window_bounds = array<i64: 32, 512>}]} {
    %c0 = arith.constant 0 : index
    %c0_0 = arith.constant 0 : index
    %0 = vector.load %arg1[%c0, %c0_0] : memref<128x324xbf16, #tpu.memory_space<vmem>>, vector<128x324xbf16>
    %c0_1 = arith.constant 0 : index
    %c0_2 = arith.constant 0 : index
    %1 = vector.load %arg3[%c0_1, %c0_2] : memref<324x512xbf16, #tpu.memory_space<vmem>>, vector<324x512xbf16>
    %cst = arith.constant dense<0.000000e+00> : vector<128x512xf32>
    %2 = tpu.matmul %0, %1, %cst {dimension_numbers = #tpu.dot_dimension_numbers<[1], [0], [0], [1], [0, 0, 1, 1], [], []>} : vector<128x324xbf16>, vector<324x512xbf16>, vector<128x512xf32> -> vector<128x512xf32>
    %c0_3 = arith.constant 0 : index
    %c0_4 = arith.constant 0 : index
    %3 = vector.load %arg2[%c0_3, %c0_4] : memref<128x1xf32, #tpu.memory_space<vmem>>, vector<128x1xf32>
    %4 = vector.broadcast %3 : vector<128x1xf32> to vector<128x512xf32>
    %5 = arith.addf %2, %4 : vector<128x512xf32>
    %6 = vector.extract_strided_slice %5 {offsets = [0, 0], sizes = [32, 512], strides = [1, 1]} : vector<128x512xf32> to vector<32x512xf32>
    %7 = vector.extract_strided_slice %5 {offsets = [32, 0], sizes = [32, 512], strides = [1, 1]} : vector<128x512xf32> to vector<32x512xf32>
    %8 = vector.extract_strided_slice %5 {offsets = [64, 0], sizes = [32, 512], strides = [1, 1]} : vector<128x512xf32> to vector<32x512xf32>
    %9 = vector.extract_strided_slice %5 {offsets = [96, 0], sizes = [32, 512], strides = [1, 1]} : vector<128x512xf32> to vector<32x512xf32>
    %c0_5 = arith.constant 0 : index
    %c0_6 = arith.constant 0 : index
    %10 = vector.load %arg4[%c0_5, %c0_6] : memref<32x512xf32, #tpu.memory_space<vmem>>, vector<32x512xf32>
    %11 = arith.negf %6 : vector<32x512xf32>
    %12 = math.exp %11 : vector<32x512xf32>
    %cst_7 = arith.constant 1.000000e+00 : f32
    %13 = vector.broadcast %cst_7 : f32 to vector<32x512xf32>
    %14 = arith.addf %13, %12 : vector<32x512xf32>
    %15 = arith.divf %13, %14 : vector<32x512xf32>
    %16 = arith.negf %7 : vector<32x512xf32>
    %17 = math.exp %16 : vector<32x512xf32>
    %cst_8 = arith.constant 1.000000e+00 : f32
    %18 = vector.broadcast %cst_8 : f32 to vector<32x512xf32>
    %19 = arith.addf %18, %17 : vector<32x512xf32>
    %20 = arith.divf %18, %19 : vector<32x512xf32>
    %21 = math.tanh %9 : vector<32x512xf32>
    %22 = arith.mulf %20, %10 : vector<32x512xf32>
    %23 = arith.mulf %15, %21 : vector<32x512xf32>
    %24 = arith.addf %22, %23 : vector<32x512xf32>
    %25 = arith.negf %8 : vector<32x512xf32>
    %26 = math.exp %25 : vector<32x512xf32>
    %cst_9 = arith.constant 1.000000e+00 : f32
    %27 = vector.broadcast %cst_9 : f32 to vector<32x512xf32>
    %28 = arith.addf %27, %26 : vector<32x512xf32>
    %29 = arith.divf %27, %28 : vector<32x512xf32>
    %30 = math.tanh %24 : vector<32x512xf32>
    %31 = arith.mulf %29, %30 : vector<32x512xf32>
    %c0_10 = arith.constant 0 : index
    %c0_11 = arith.constant 0 : index
    %32 = vector.load %arg5[%c0_10, %c0_11] : memref<32x512xf32, #tpu.memory_space<vmem>>, vector<32x512xf32>
    tpu.vector_store %arg5[%c0_10, %c0_11], %31 {strides = array<i32>} : memref<32x512xf32, #tpu.memory_space<vmem>>, vector<32x512xf32>,
    %c0_12 = arith.constant 0 : index
    %c0_13 = arith.constant 0 : index
    %33 = vector.load %arg6[%c0_12, %c0_13] : memref<32x512xf32, #tpu.memory_space<vmem>>, vector<32x512xf32>
    tpu.vector_store %arg6[%c0_12, %c0_13], %24 {strides = array<i32>} : memref<32x512xf32, #tpu.memory_space<vmem>>, vector<32x512xf32>,
    return
  }
  func.func @transform_0(%arg0: i32) -> (i32, i32) {
    %c0_i32 = arith.constant 0 : i32
    %c0_i32_0 = arith.constant 0 : i32
    %c0_i32_1 = arith.constant 0 : i32
    return %c0_i32, %c0_i32_0 : i32, i32
  }
  func.func @transform_1(%arg0: i32) -> (i32, i32) {
    %c0_i32 = arith.constant 0 : i32
    %c0_i32_0 = arith.constant 0 : i32
    %c0_i32_1 = arith.constant 0 : i32
    return %c0_i32, %c0_i32_0 : i32, i32
  }
  func.func @transform_2(%arg0: i32) -> (i32, i32) {
    %c0_i32 = arith.constant 0 : i32
    %c0_i32_0 = arith.constant 0 : i32
    return %c0_i32, %arg0 : i32, i32
  }
  func.func @transform_3(%arg0: i32) -> (i32, i32) {
    %c0_i32 = arith.constant 0 : i32
    %c0_i32_0 = arith.constant 0 : i32
    return %c0_i32, %arg0 : i32, i32
  }
  func.func @transform_4(%arg0: i32) -> (i32, i32) {
    %c0_i32 = arith.constant 0 : i32
    %c0_i32_0 = arith.constant 0 : i32
    return %c0_i32, %arg0 : i32, i32
  }
  func.func @transform_5(%arg0: i32) -> (i32, i32) {
    %c0_i32 = arith.constant 0 : i32
    %c0_i32_0 = arith.constant 0 : i32
    return %c0_i32, %arg0 : i32, i32
  }
}

</mosaic_0001>

<llo_original>
// kernel: tpu_custom_call.1
$region0: #{tpu_custom_call.1}
  #allocation0 [shape = 'u32[]', space=smem, size = 0x4, offset = 0x4, fixed_abs, tag = 'smem constant byte address 0x4 - core index']
  #allocation1 [shape = 'u32[72,128]{1,0:T(1,128)}', space=vmem, size = 0x9000, scoped, tag = 'internal scratch']
  %s0 = inlined_call_operand.vmem [shape: bf16[128,324], index: 0, kind: input, shape index: {}]
  %s1 = inlined_call_operand.vmem [shape: f32[128,1], index: 1, kind: input, shape index: {}]
  %s2 = inlined_call_operand.hbm [shape: bf16[324,2048], index: 2, kind: input, shape index: {}]
  %s3 = inlined_call_operand.hbm [shape: f32[32,2048], index: 3, kind: input, shape index: {}]
  %s4 = inlined_call_operand.hbm [shape: f32[32,2048], index: 4, kind: output, shape index: {0}]
  %s5 = inlined_call_operand.hbm [shape: f32[32,2048], index: 5, kind: output, shape index: {1}]
  %6 = xla_tuple %s4, %s5
  %s7 = sld [smem:[#allocation0]]
  $region65: #{tpu_custom_call.1} parent=0
    _
  %s9 = ssub.s32 1, %s7
  %s10 = scalar_select 0, %s9, %s7
  $region1: #{tpu_custom_call.1} parent=0
    #allocation2 [shape = 'u8[671744]{0}', space=vmem, size = 0xa4000, scoped, tag = 'input window, operand 2']
    #allocation3 [shape = 's32[2]{0}', space=sflag, size = 0x8, scoped, tag = 'scoped memory for tpu_custom_call.1']
    #allocation4 [shape = 's32[2]{0}', space=sflag, size = 0x8, scoped, tag = 'scoped memory for tpu_custom_call.1']
    #allocation5 [shape = 'u8[131072]{0}', space=vmem, size = 0x20000, scoped, tag = 'input window, operand 3']
    #allocation6 [shape = 's32[2]{0}', space=sflag, size = 0x8, scoped, tag = 'scoped memory for tpu_custom_call.1']
    #allocation7 [shape = 'u8[131072]{0}', space=vmem, size = 0x20000, scoped, tag = 'output window, operand 0']
    #allocation8 [shape = 'u8[131072]{0}', space=vmem, size = 0x20000, scoped, tag = 'output window, operand 1']
    #allocation9 [shape = 's32[2]{0}', space=sflag, size = 0x8, scoped, tag = 'scoped memory for tpu_custom_call.1']
    %11 = vsyncpa [#allocation3], 0
    %s12 = scalar_lea.sflag [#allocation3], 1
    %13 = vsyncpa %s12, 0
    %14 = vsyncpa [#allocation6], 0
    %s15 = scalar_lea.sflag [#allocation6], 1
    %16 = vsyncpa %s15, 0
    %17 = vsyncpa [#allocation4], 0
    %s18 = scalar_lea.sflag [#allocation4], 1
    %19 = vsyncpa %s18, 0
    %20 = vsyncpa [#allocation9], 0
    %s21 = scalar_lea.sflag [#allocation9], 1
    %22 = vsyncpa %s21, 0
    loop: start=0, step=1, limit=6
    $region2: #{tpu_custom_call.1} parent=1 // loop_pre_header
      _
    $region3: #{tpu_custom_call.1} parent=1 // loop_header
      %s24 = sphi 0, %s28
      %p25 = scmp.ge.s32.totalorder %s24, 6
      %s32 = sphi 0, %s32
      %s34 = sphi 0, %s32
      %s35 = sphi 0, %s34
      %s49 = sphi 0, %s35
      %s53 = sphi 0, %s53
      %s55 = sphi 0, %s53
      %s56 = sphi 0, %s55
      %s70 = sphi 0, %s56
      %s76 = sphi 0, %s78
      %s79 = sphi 0, %s76
      %s80 = sphi 0, %s79
      %s96 = sphi 0, %s80
      %s102 = sphi 0, %s104
      %s105 = sphi 0, %s102
      %s106 = sphi 0, %s105
      %s122 = sphi 0, %s106
      %s128 = sphi 0, %s130
      %s131 = sphi 0, %s128
      %s132 = sphi 0, %s131
      %s148 = sphi 0, %s132
      %s154 = sphi 0, %s156
      %s157 = sphi 0, %s154
      %s158 = sphi 0, %s157
      %s174 = sphi 0, %s158
    $region4: #{tpu_custom_call.1} parent=1 // loop_header_branch
      %27 = sbr.rel (%p25) target = $region8
    $region5: #{tpu_custom_call.1} parent=1 // loop_body
      %s29 = ssub.s32 %s24, 1
      %s30 = ssub.s32 %s24, 2
      %s31 = sadd.s32 %s24, 1
      %s33 = sadd.s32 %s32, 1
      %p36 = scmp.eq.s32.totalorder %s24, 3
      %p37 = scmp.ne.s32.totalorder %s32, %s34
      %p38 = scmp.eq.s32.totalorder %s24, 0
      %p39 = por %p37, %p38
      %p40 = scmp.ne.s32.totalorder %s32, %s34
      %p41 = scmp.eq.s32.totalorder %s29, 3
      %p42 = por %p40, %p41
      %p43 = scmp.ne.s32.totalorder %s34, %s35
      %p44 = scmp.eq.s32.totalorder %s29, 0
      %p45 = por %p43, %p44
      %p46 = scmp.ne.s32.totalorder %s34, %s35
      %p47 = scmp.eq.s32.totalorder %s30, 3
      %p48 = por %p46, %p47
      %p50 = scmp.ne.s32.totalorder %s35, %s49
      %p51 = scmp.eq.s32.totalorder %s30, 0
      %p52 = por %p50, %p51
      %s54 = sadd.s32 %s53, 1
      %p57 = scmp.eq.s32.totalorder %s24, 3
      %p58 = scmp.ne.s32.totalorder %s53, %s55
      %p59 = scmp.eq.s32.totalorder %s24, 0
      %p60 = por %p58, %p59
      %p61 = scmp.ne.s32.totalorder %s53, %s55
      %p62 = scmp.eq.s32.totalorder %s29, 3
      %p63 = por %p61, %p62
      %p64 = scmp.ne.s32.totalorder %s55, %s56
      %p65 = scmp.eq.s32.totalorder %s29, 0
      %p66 = por %p64, %p65
      %p67 = scmp.ne.s32.totalorder %s55, %s56
      %p68 = scmp.eq.s32.totalorder %s30, 3
      %p69 = por %p67, %p68
      %p71 = scmp.ne.s32.totalorder %s56, %s70
      %p72 = scmp.eq.s32.totalorder %s30, 0
      %p73 = por %p71, %p72
      %s74 = ssub.s32 %s24, %s31
      %p75 = scmp.eq.s32.totalorder %s74, 0
      %s77 = sadd.s32 %s76, 1
      %s78 = scalar_select %p75, %s76, %s77
      %p81 = pneg %p75
      %p82 = scmp.eq.s32.totalorder %s24, 3
      %p83 = por %p81, %p82
      %p84 = scmp.ne.s32.totalorder %s76, %s79
      %p85 = scmp.eq.s32.totalorder %s24, 0
      %p86 = por %p84, %p85
      %p87 = scmp.ne.s32.totalorder %s76, %s79
      %p88 = scmp.eq.s32.totalorder %s29, 3
      %p89 = por %p87, %p88
      %p90 = scmp.ne.s32.totalorder %s79, %s80
      %p91 = scmp.eq.s32.totalorder %s29, 0
      %p92 = por %p90, %p91
      %p93 = scmp.ne.s32.totalorder %s79, %s80
      %p94 = scmp.eq.s32.totalorder %s30, 3
      %p95 = por %p93, %p94
      %p97 = scmp.ne.s32.totalorder %s80, %s96
      %p98 = scmp.eq.s32.totalorder %s30, 0
      %p99 = por %p97, %p98
      %s100 = ssub.s32 %s24, %s31
      %p101 = scmp.eq.s32.totalorder %s100, 0
      %s103 = sadd.s32 %s102, 1
      %s104 = scalar_select %p101, %s102, %s103
      %p107 = pneg %p101
      %p108 = scmp.eq.s32.totalorder %s24, 3
      %p109 = por %p107, %p108
      %p110 = scmp.ne.s32.totalorder %s102, %s105
      %p111 = scmp.eq.s32.totalorder %s24, 0
      %p112 = por %p110, %p111
      %p113 = scmp.ne.s32.totalorder %s102, %s105
      %p114 = scmp.eq.s32.totalorder %s29, 3
      %p115 = por %p113, %p114
      %p116 = scmp.ne.s32.totalorder %s105, %s106
      %p117 = scmp.eq.s32.totalorder %s29, 0
      %p118 = por %p116, %p117
      %p119 = scmp.ne.s32.totalorder %s105, %s106
      %p120 = scmp.eq.s32.totalorder %s30, 3
      %p121 = por %p119, %p120
      %p123 = scmp.ne.s32.totalorder %s106, %s122
      %p124 = scmp.eq.s32.totalorder %s30, 0
      %p125 = por %p123, %p124
      %s126 = ssub.s32 %s24, %s31
      %p127 = scmp.eq.s32.totalorder %s126, 0
      %s129 = sadd.s32 %s128, 1
      %s130 = scalar_select %p127, %s128, %s129
      %p133 = pneg %p127
      %p134 = scmp.eq.s32.totalorder %s24, 3
      %p135 = por %p133, %p134
      %p136 = scmp.ne.s32.totalorder %s128, %s131
      %p137 = scmp.eq.s32.totalorder %s24, 0
      %p138 = por %p136, %p137
      %p139 = scmp.ne.s32.totalorder %s128, %s131
      %p140 = scmp.eq.s32.totalorder %s29, 3
      %p141 = por %p139, %p140
      %p142 = scmp.ne.s32.totalorder %s131, %s132
      %p143 = scmp.eq.s32.totalorder %s29, 0
      %p144 = por %p142, %p143
      %p145 = scmp.ne.s32.totalorder %s131, %s132
      %p146 = scmp.eq.s32.totalorder %s30, 3
      %p147 = por %p145, %p146
      %p149 = scmp.ne.s32.totalorder %s132, %s148
      %p150 = scmp.eq.s32.totalorder %s30, 0
      %p151 = por %p149, %p150
      %s152 = ssub.s32 %s24, %s31
      %p153 = scmp.eq.s32.totalorder %s152, 0
      %s155 = sadd.s32 %s154, 1
      %s156 = scalar_select %p153, %s154, %s155
      %p159 = pneg %p153
      %p160 = scmp.eq.s32.totalorder %s24, 3
      %p161 = por %p159, %p160
      %p162 = scmp.ne.s32.totalorder %s154, %s157
      %p163 = scmp.eq.s32.totalorder %s24, 0
      %p164 = por %p162, %p163
      %p165 = scmp.ne.s32.totalorder %s154, %s157
      %p166 = scmp.eq.s32.totalorder %s29, 3
      %p167 = por %p165, %p166
      %p168 = scmp.ne.s32.totalorder %s157, %s158
      %p169 = scmp.eq.s32.totalorder %s29, 0
      %p170 = por %p168, %p169
      %p171 = scmp.ne.s32.totalorder %s157, %s158
      %p172 = scmp.eq.s32.totalorder %s30, 3
      %p173 = por %p171, %p172
      %p175 = scmp.ne.s32.totalorder %s158, %s174
      %p176 = scmp.eq.s32.totalorder %s30, 0
      %p177 = por %p175, %p176
      %p178 = scmp.le.s32.totalorder 1, %s24
      %p179 = scmp.lt.s32.totalorder %s24, 5
      %p180 = pnand %p178, %p179
      %p181 = pneg %p180
      // Predicated region
      $region9: #{tpu_custom_call.1} parent=5 // pred_check
        _
      $region10: #{tpu_custom_call.1} parent=5 // pred_check_branch
        %183 = sbr.rel (%p180) target = $region12
      $region11: #{tpu_custom_call.1} parent=5 // pred_region
        %s184 = ssub.s32 %s24, 1
        // Predicated region
        $region13: #{tpu_custom_call.1} parent=11 // pred_check
          %p185 = pneg %p45
        $region14: #{tpu_custom_call.1} parent=11 // pred_check_branch
          %187 = sbr.rel (%p185) target = $region16
        $region15: #{tpu_custom_call.1} parent=11 // pred_region
          _
        $region16: #{tpu_custom_call.1} parent=11 // pred_fallthru
          _
        // Predicated region
        $region17: #{tpu_custom_call.1} parent=11 // pred_check
          %p188 = pneg %p66
        $region18: #{tpu_custom_call.1} parent=11 // pred_check_branch
          %190 = sbr.rel (%p188) target = $region20
        $region19: #{tpu_custom_call.1} parent=11 // pred_region
          _
        $region20: #{tpu_custom_call.1} parent=11 // pred_fallthru
          _
      $region12: #{tpu_custom_call.1} parent=5 // pred_fallthru
        _
      %p191 = scmp.lt.s32.totalorder %s24, 4
      // Predicated region
      $region21: #{tpu_custom_call.1} parent=5 // pred_check
        %p192 = pneg %p191
      $region22: #{tpu_custom_call.1} parent=5 // pred_check_branch
        %194 = sbr.rel (%p192) target = $region24
      $region23: #{tpu_custom_call.1} parent=5 // pred_region
        // Predicated region
        $region25: #{tpu_custom_call.1} parent=23 // pred_check
          %p195 = pneg %p86
        $region26: #{tpu_custom_call.1} parent=23 // pred_check_branch
          %197 = sbr.rel (%p195) target = $region28
        $region27: #{tpu_custom_call.1} parent=23 // pred_region
          %s198 = sand.u32 %s76, 1
          %s199 = scalar_lea.sflag [#allocation3], %s198
          %s200 = sand.u32 %s76, 1
          %s201 = smul.addr %s200, 656
          %s202 = scalar_lea.vmem [#allocation2], %s201
          %s203 = smul.u32 4, %s24
          %205 = vsyncadd %s199, 0
          %s206 = smul.addr %s203, 4
          %s207 = scalar_lea.hbm %s2, %s206
          %s208 = sshll.u32 %s207, 4
          %s209 = int_to_ptr.hbm [resolvable:$true] %s208
          %s210 = sshll.u32 %s202, 4
          %s211 = int_to_ptr.vmem [resolvable:$true] %s210
          %216 = dma.hbm_to_vmem [thread:$0]  %s209, 10496, %s211, %s199, 1024, 256, 16
        $region28: #{tpu_custom_call.1} parent=23 // pred_fallthru
          _
        // Predicated region
        $region29: #{tpu_custom_call.1} parent=23 // pred_check
          %p217 = pneg %p112
        $region30: #{tpu_custom_call.1} parent=23 // pred_check_branch
          %219 = sbr.rel (%p217) target = $region32
        $region31: #{tpu_custom_call.1} parent=23 // pred_region
          %s220 = sand.u32 %s102, 1
          %s221 = scalar_lea.sflag [#allocation6], %s220
          %s222 = sand.u32 %s102, 1
          %s223 = smul.addr %s222, 128
          %s224 = scalar_lea.vmem [#allocation5], %s223
          %s225 = smul.u32 4, %s24
          %227 = vsyncadd %s221, 0
          %s228 = smul.addr %s225, 8
          %s229 = scalar_lea.hbm %s3, %s228
          %s230 = sshll.u32 %s229, 4
          %s231 = int_to_ptr.hbm [resolvable:$true] %s230
          %s232 = sshll.u32 %s224, 4
          %s233 = int_to_ptr.vmem [resolvable:$true] %s232
          %238 = dma.hbm_to_vmem [thread:$0]  %s231, 2048, %s233, %s221, 2048, 512, 32
        $region32: #{tpu_custom_call.1} parent=23 // pred_fallthru
          _
      $region24: #{tpu_custom_call.1} parent=5 // pred_fallthru
        _
      %p239 = scmp.le.s32.totalorder 1, %s24
      %p240 = scmp.lt.s32.totalorder %s24, 5
      %p241 = pnand %p239, %p240
      %p242 = pneg %p241
      // Predicated region
      $region33: #{tpu_custom_call.1} parent=5 // pred_check
        _
      $region34: #{tpu_custom_call.1} parent=5 // pred_check_branch
        %244 = sbr.rel (%p241) target = $region36
      $region35: #{tpu_custom_call.1} parent=5 // pred_region
        %s245 = ssub.s32 %s24, 1
        %s246 = sand.u32 %s79, 1
        %s247 = scalar_lea.sflag [#allocation3], %s246
        %s248 = sand.u32 %s79, 1
        %s249 = smul.addr %s248, 656
        %s250 = scalar_lea.vmem [#allocation2], %s249
        // Predicated region
        $region37: #{tpu_custom_call.1} parent=35 // pred_check
          %p251 = pneg %p92
        $region38: #{tpu_custom_call.1} parent=35 // pred_check_branch
          %253 = sbr.rel (%p251) target = $region40
        $region39: #{tpu_custom_call.1} parent=35 // pred_region
          %255 = dma.done %s247, 10496
        $region40: #{tpu_custom_call.1} parent=35 // pred_fallthru
          _
        %s256 = sand.u32 %s105, 1
        %s257 = scalar_lea.sflag [#allocation6], %s256
        %s258 = sand.u32 %s105, 1
        %s259 = smul.addr %s258, 128
        %s260 = scalar_lea.vmem [#allocation5], %s259
        // Predicated region
        $region41: #{tpu_custom_call.1} parent=35 // pred_check
          %p261 = pneg %p118
        $region42: #{tpu_custom_call.1} parent=35 // pred_check_branch
          %263 = sbr.rel (%p261) target = $region44
        $region43: #{tpu_custom_call.1} parent=35 // pred_region
          %265 = dma.done %s257, 2048
        $region44: #{tpu_custom_call.1} parent=35 // pred_fallthru
          _
        %p266 = pneg %p45
        %p267 = pneg %p42
        %p268 = pneg %p66
        %p269 = pneg %p63
        %s270 = sand.u32 %s79, 1
        %s271 = scalar_lea.sflag [#allocation3], %s270
        %s272 = sand.u32 %s79, 1
        %s273 = smul.addr %s272, 656
        %s274 = scalar_lea.vmem [#allocation2], %s273
        %p275 = pneg %p92
        %p276 = pneg %p89
        %s277 = sand.u32 %s105, 1
        %s278 = scalar_lea.sflag [#allocation6], %s277
        %s279 = sand.u32 %s105, 1
        %s280 = smul.addr %s279, 128
        %s281 = scalar_lea.vmem [#allocation5], %s280
        %p282 = pneg %p118
        %p283 = pneg %p115
        %p284 = pneg %p144
        %p285 = pneg %p141
        %s286 = sand.u32 %s131, 1
        %s287 = scalar_lea.sflag [#allocation4], %s286
        %s288 = sand.u32 %s131, 1
        %s289 = smul.addr %s288, 128
        %s290 = scalar_lea.vmem [#allocation7], %s289
        %p291 = pneg %p170
        %p292 = pneg %p167
        %s293 = sand.u32 %s157, 1
        %s294 = scalar_lea.sflag [#allocation9], %s293
        %s295 = sand.u32 %s157, 1
        %s296 = smul.addr %s295, 128
        %s297 = scalar_lea.vmem [#allocation8], %s296
        %s298 = smul.u32 4, %s29
        %s299 = smul.u32 4, %s29
        %s300 = smul.u32 4, %s29
        %s301 = smul.u32 4, %s29
        %v303 = vld [vmem:[%s0] sm:$0xff]
        %v304 = vld [vmem:[%s0 + $0x8] sm:$0xf]
        %v305 = vld [vmem:[%s0 + $0xc] sm:$0xff]
        %v306 = vld [vmem:[%s0 + $0x14] sm:$0xf]
        %v307 = vld [vmem:[%s0 + $0x18] sm:$0xff]
        %v308 = vld [vmem:[%s0 + $0x20] sm:$0xf]
        %v309 = vld [vmem:[%s0 + $0x24] sm:$0xff]
        %v310 = vld [vmem:[%s0 + $0x2c] sm:$0xf]
        %v311 = vld [vmem:[%s0 + $0x30] sm:$0xff]
        %v312 = vld [vmem:[%s0 + $0x38] sm:$0xf]
        %v313 = vld [vmem:[%s0 + $0x3c] sm:$0xff]
        %v314 = vld [vmem:[%s0 + $0x44] sm:$0xf]
        %v315 = vld [vmem:[%s0 + $0x48] sm:$0xff]
        %v316 = vld [vmem:[%s0 + $0x50] sm:$0xf]
        %v317 = vld [vmem:[%s0 + $0x54] sm:$0xff]
        %v318 = vld [vmem:[%s0 + $0x5c] sm:$0xf]
        %v319 = vld [vmem:[%s0 + $0x60] sm:$0xff]
        %v320 = vld [vmem:[%s0 + $0x68] sm:$0xf]
        %v321 = vld [vmem:[%s0 + $0x6c] sm:$0xff]
        %v322 = vld [vmem:[%s0 + $0x74] sm:$0xf]
        %v323 = vld [vmem:[%s0 + $0x78] sm:$0xff]
        %v324 = vld [vmem:[%s0 + $0x80] sm:$0xf]
        %v325 = vld [vmem:[%s0 + $0x84] sm:$0xff]
        %v326 = vld [vmem:[%s0 + $0x8c] sm:$0xf]
        %v327 = vld [vmem:[%s0 + $0x90] sm:$0xff]
        %v328 = vld [vmem:[%s0 + $0x98] sm:$0xf]
        %v329 = vld [vmem:[%s0 + $0x9c] sm:$0xff]
        %v330 = vld [vmem:[%s0 + $0xa4] sm:$0xf]
        %v331 = vld [vmem:[%s0 + $0xa8] sm:$0xff]
        %v332 = vld [vmem:[%s0 + $0xb0] sm:$0xf]
        %v333 = vld [vmem:[%s0 + $0xb4] sm:$0xff]
        %v334 = vld [vmem:[%s0 + $0xbc] sm:$0xf]
        %v335 = vld [vmem:[%s250] sm:$0xff]
        %v336 = vld [vmem:[%s250 + $0x8] sm:$0xff]
        %v337 = vld [vmem:[%s250 + $0x10] sm:$0xff]
        %v338 = vld [vmem:[%s250 + $0x18] sm:$0xff]
        %v339 = vld [vmem:[%s250 + $0x20] sm:$0xff]
        %v340 = vld [vmem:[%s250 + $0x28] sm:$0xff]
        %v341 = vld [vmem:[%s250 + $0x30] sm:$0xff]
        %v342 = vld [vmem:[%s250 + $0x38] sm:$0xff]
        %v343 = vld [vmem:[%s250 + $0x40] sm:$0xff]
        %v344 = vld [vmem:[%s250 + $0x48] sm:$0xff]
        %v345 = vld [vmem:[%s250 + $0x50] sm:$0xff]
        %v346 = vld [vmem:[%s250 + $0x58] sm:$0xff]
        %v347 = vld [vmem:[%s250 + $0x60] sm:$0xff]
        %v348 = vld [vmem:[%s250 + $0x68] sm:$0xff]
        %v349 = vld [vmem:[%s250 + $0x70] sm:$0xff]
        %v350 = vld [vmem:[%s250 + $0x78] sm:$0xff]
        %v351 = vld [vmem:[%s250 + $0x80] sm:$0xff]
        %v352 = vld [vmem:[%s250 + $0x88] sm:$0xff]
        %v353 = vld [vmem:[%s250 + $0x90] sm:$0xff]
        %v354 = vld [vmem:[%s250 + $0x98] sm:$0xff]
        %v355 = vld [vmem:[%s250 + $0xa0] sm:$0xff]
        %v356 = vld [vmem:[%s250 + $0xa8] sm:$0xff]
        %v357 = vld [vmem:[%s250 + $0xb0] sm:$0xff]
        %v358 = vld [vmem:[%s250 + $0xb8] sm:$0xff]
        %v359 = vld [vmem:[%s250 + $0xc0] sm:$0xff]
        %v360 = vld [vmem:[%s250 + $0xc8] sm:$0xff]
        %v361 = vld [vmem:[%s250 + $0xd0] sm:$0xff]
        %v362 = vld [vmem:[%s250 + $0xd8] sm:$0xff]
        %v363 = vld [vmem:[%s250 + $0xe0] sm:$0xff]
        %v364 = vld [vmem:[%s250 + $0xe8] sm:$0xff]
        %v365 = vld [vmem:[%s250 + $0xf0] sm:$0xff]
        %v366 = vld [vmem:[%s250 + $0xf8] sm:$0xff]
        %v367 = vld [vmem:[%s250 + $0x100] sm:$0xff]
        %v368 = vld [vmem:[%s250 + $0x108] sm:$0xff]
        %v369 = vld [vmem:[%s250 + $0x110] sm:$0xff]
        %v370 = vld [vmem:[%s250 + $0x118] sm:$0xff]
        %v371 = vld [vmem:[%s250 + $0x120] sm:$0xff]
        %v372 = vld [vmem:[%s250 + $0x128] sm:$0xff]
        %v373 = vld [vmem:[%s250 + $0x130] sm:$0xff]
        %v374 = vld [vmem:[%s250 + $0x138] sm:$0xff]
        %v375 = vld [vmem:[%s250 + $0x140] sm:$0xff]
        %v376 = vld [vmem:[%s250 + $0x148] sm:$0xff]
        %v377 = vld [vmem:[%s250 + $0x150] sm:$0xff]
        %v378 = vld [vmem:[%s250 + $0x158] sm:$0xff]
        %v379 = vld [vmem:[%s250 + $0x160] sm:$0xff]
        %v380 = vld [vmem:[%s250 + $0x168] sm:$0xff]
        %v381 = vld [vmem:[%s250 + $0x170] sm:$0xff]
        %v382 = vld [vmem:[%s250 + $0x178] sm:$0xff]
        %v383 = vld [vmem:[%s250 + $0x180] sm:$0xff]
        %v384 = vld [vmem:[%s250 + $0x188] sm:$0xff]
        %v385 = vld [vmem:[%s250 + $0x190] sm:$0xff]
        %v386 = vld [vmem:[%s250 + $0x198] sm:$0xff]
        %v387 = vld [vmem:[%s250 + $0x1a0] sm:$0xff]
        %v388 = vld [vmem:[%s250 + $0x1a8] sm:$0xff]
        %v389 = vld [vmem:[%s250 + $0x1b0] sm:$0xff]
        %v390 = vld [vmem:[%s250 + $0x1b8] sm:$0xff]
        %v391 = vld [vmem:[%s250 + $0x1c0] sm:$0xff]
        %v392 = vld [vmem:[%s250 + $0x1c8] sm:$0xff]
        %v393 = vld [vmem:[%s250 + $0x1d0] sm:$0xff]
        %v394 = vld [vmem:[%s250 + $0x1d8] sm:$0xff]
        %v395 = vld [vmem:[%s250 + $0x1e0] sm:$0xff]
        %v396 = vld [vmem:[%s250 + $0x1e8] sm:$0xff]
        %v397 = vld [vmem:[%s250 + $0x1f0] sm:$0xff]
        %v398 = vld [vmem:[%s250 + $0x1f8] sm:$0xff]
        %v399 = vld [vmem:[%s250 + $0x200] sm:$0xff]
        %v400 = vld [vmem:[%s250 + $0x208] sm:$0xff]
        %v401 = vld [vmem:[%s250 + $0x210] sm:$0xff]
        %v402 = vld [vmem:[%s250 + $0x218] sm:$0xff]
        %v403 = vld [vmem:[%s250 + $0x220] sm:$0xff]
        %v404 = vld [vmem:[%s250 + $0x228] sm:$0xff]
        %v405 = vld [vmem:[%s250 + $0x230] sm:$0xff]
        %v406 = vld [vmem:[%s250 + $0x238] sm:$0xff]
        %v407 = vld [vmem:[%s250 + $0x240] sm:$0xff]
        %v408 = vld [vmem:[%s250 + $0x248] sm:$0xff]
        %v409 = vld [vmem:[%s250 + $0x250] sm:$0xff]
        %v410 = vld [vmem:[%s250 + $0x258] sm:$0xff]
        %v411 = vld [vmem:[%s250 + $0x260] sm:$0xff]
        %v412 = vld [vmem:[%s250 + $0x268] sm:$0xff]
        %v413 = vld [vmem:[%s250 + $0x270] sm:$0xff]
        %v414 = vld [vmem:[%s250 + $0x278] sm:$0xff]
        %v415 = vld [vmem:[%s250 + $0x280] sm:$0x33]
        %v416 = vld [vmem:[%s250 + $0x288] sm:$0x33]
        %v417 = vld [vmem:[%s1] sm:$0xff]
        %v418 = vld [vmem:[%s1 + $0x8] sm:$0xff]
        %v419 = vld [vmem:[%s1 + $0x10] sm:$0xff]
        %v420 = vld [vmem:[%s1 + $0x18] sm:$0xff]
        %v421 = vld [vmem:[%s1 + $0x20] sm:$0xff]
        %v422 = vld [vmem:[%s1 + $0x28] sm:$0xff]
        %v423 = vld [vmem:[%s1 + $0x30] sm:$0xff]
        %v424 = vld [vmem:[%s1 + $0x38] sm:$0xff]
        %v425 = vld [vmem:[%s1 + $0x40] sm:$0xff]
        %v426 = vld [vmem:[%s1 + $0x48] sm:$0xff]
        %v427 = vld [vmem:[%s1 + $0x50] sm:$0xff]
        %v428 = vld [vmem:[%s1 + $0x58] sm:$0xff]
        %v429 = vld [vmem:[%s1 + $0x60] sm:$0xff]
        %v430 = vld [vmem:[%s1 + $0x68] sm:$0xff]
        %v431 = vld [vmem:[%s1 + $0x70] sm:$0xff]
        %v432 = vld [vmem:[%s1 + $0x78] sm:$0xff]
        %434 = vset.pattern.permute.xlu0 0
        %435 = vperm.xlu0 %434, %v417
        %v436 = vpop.permute.xlu0 %435
        %439 = vset.pattern.permute.xlu0 0
        %440 = vperm.xlu0 %439, %v418
        %v441 = vpop.permute.xlu0 %440
        %444 = vset.pattern.permute.xlu0 0
        %445 = vperm.xlu0 %444, %v419
        %v446 = vpop.permute.xlu0 %445
        %449 = vset.pattern.permute.xlu0 0
        %450 = vperm.xlu0 %449, %v420
        %v451 = vpop.permute.xlu0 %450
        %454 = vset.pattern.permute.xlu0 0
        %455 = vperm.xlu0 %454, %v421
        %v456 = vpop.permute.xlu0 %455
        %459 = vset.pattern.permute.xlu0 0
        %460 = vperm.xlu0 %459, %v422
        %v461 = vpop.permute.xlu0 %460
        %464 = vset.pattern.permute.xlu0 0
        %465 = vperm.xlu0 %464, %v423
        %v466 = vpop.permute.xlu0 %465
        %469 = vset.pattern.permute.xlu0 0
        %470 = vperm.xlu0 %469, %v424
        %v471 = vpop.permute.xlu0 %470
        %474 = vset.pattern.permute.xlu0 0
        %475 = vperm.xlu0 %474, %v425
        %v476 = vpop.permute.xlu0 %475
        %479 = vset.pattern.permute.xlu0 0
        %480 = vperm.xlu0 %479, %v426
        %v481 = vpop.permute.xlu0 %480
        %484 = vset.pattern.permute.xlu0 0
        %485 = vperm.xlu0 %484, %v427
        %v486 = vpop.permute.xlu0 %485
        %489 = vset.pattern.permute.xlu0 0
        %490 = vperm.xlu0 %489, %v428
        %v491 = vpop.permute.xlu0 %490
        %494 = vset.pattern.permute.xlu0 0
        %495 = vperm.xlu0 %494, %v429
        %v496 = vpop.permute.xlu0 %495
        %499 = vset.pattern.permute.xlu0 0
        %500 = vperm.xlu0 %499, %v430
        %v501 = vpop.permute.xlu0 %500
        %504 = vset.pattern.permute.xlu0 0
        %505 = vperm.xlu0 %504, %v431
        %v506 = vpop.permute.xlu0 %505
        %509 = vset.pattern.permute.xlu0 0
        %510 = vperm.xlu0 %509, %v432
        %v511 = vpop.permute.xlu0 %510
        %v545 = vunpack.c.l.b16 %v303
        %v546 = vunpack.c.h.b16 %v303
        %v547 = vunpack.c.l.b16 %v304
        %v548 = vunpack.c.l.b16 %v305
        %v549 = vunpack.c.h.b16 %v305
        %v550 = vunpack.c.l.b16 %v306
        %v551 = vunpack.c.l.b16 %v307
        %v552 = vunpack.c.h.b16 %v307
        %v553 = vunpack.c.l.b16 %v308
        %v554 = vunpack.c.l.b16 %v309
        %v555 = vunpack.c.h.b16 %v309
        %v556 = vunpack.c.l.b16 %v310
        %v557 = vunpack.c.l.b16 %v311
        %v558 = vunpack.c.h.b16 %v311
        %v559 = vunpack.c.l.b16 %v312
        %v560 = vunpack.c.l.b16 %v313
        %v561 = vunpack.c.h.b16 %v313
        %v562 = vunpack.c.l.b16 %v314
        %v563 = vunpack.c.l.b16 %v315
        %v564 = vunpack.c.h.b16 %v315
        %v565 = vunpack.c.l.b16 %v316
        %v566 = vunpack.c.l.b16 %v317
        %v567 = vunpack.c.h.b16 %v317
        %v568 = vunpack.c.l.b16 %v318
        %v569 = vunpack.c.l.b16 %v319
        %v570 = vunpack.c.h.b16 %v319
        %v571 = vunpack.c.l.b16 %v320
        %v572 = vunpack.c.l.b16 %v321
        %v573 = vunpack.c.h.b16 %v321
        %v574 = vunpack.c.l.b16 %v322
        %v575 = vunpack.c.l.b16 %v323
        %v576 = vunpack.c.h.b16 %v323
        %v577 = vunpack.c.l.b16 %v324
        %v578 = vunpack.c.l.b16 %v325
        %v579 = vunpack.c.h.b16 %v325
        %v580 = vunpack.c.l.b16 %v326
        %v581 = vunpack.c.l.b16 %v327
        %v582 = vunpack.c.h.b16 %v327
        %v583 = vunpack.c.l.b16 %v328
        %v584 = vunpack.c.l.b16 %v329
        %v585 = vunpack.c.h.b16 %v329
        %v586 = vunpack.c.l.b16 %v330
        %v587 = vunpack.c.l.b16 %v331
        %v588 = vunpack.c.h.b16 %v331
        %v589 = vunpack.c.l.b16 %v332
        %v590 = vunpack.c.l.b16 %v333
        %v591 = vunpack.c.h.b16 %v333
        %v592 = vunpack.c.l.b16 %v334
        %v593 = vpack.c.b16 %v548, %v545
        %v594 = vpack.c.b16 %v549, %v546
        %v595 = vpack.c.b16 %v550, %v547
        %v596 = vpack.c.b16 %v554, %v551
        %v597 = vpack.c.b16 %v555, %v552
        %v598 = vpack.c.b16 %v556, %v553
        %v599 = vpack.c.b16 %v560, %v557
        %v600 = vpack.c.b16 %v561, %v558
        %v601 = vpack.c.b16 %v562, %v559
        %v602 = vpack.c.b16 %v566, %v563
        %v603 = vpack.c.b16 %v567, %v564
        %v604 = vpack.c.b16 %v568, %v565
        %v605 = vpack.c.b16 %v572, %v569
        %v606 = vpack.c.b16 %v573, %v570
        %v607 = vpack.c.b16 %v574, %v571
        %v608 = vpack.c.b16 %v578, %v575
        %v609 = vpack.c.b16 %v579, %v576
        %v610 = vpack.c.b16 %v580, %v577
        %v611 = vpack.c.b16 %v584, %v581
        %v612 = vpack.c.b16 %v585, %v582
        %v613 = vpack.c.b16 %v586, %v583
        %v614 = vpack.c.b16 %v590, %v587
        %v615 = vpack.c.b16 %v591, %v588
        %v616 = vpack.c.b16 %v592, %v589
        %v715 = vunpack.c.l.b16 %v335
        %v716 = vunpack.c.h.b16 %v335
        %v717 = vunpack.c.l.b16 %v336
        %v718 = vunpack.c.h.b16 %v336
        %v719 = vunpack.c.l.b16 %v337
        %v720 = vunpack.c.h.b16 %v337
        %v721 = vunpack.c.l.b16 %v338
        %v722 = vunpack.c.h.b16 %v338
        %v723 = vunpack.c.l.b16 %v339
        %v724 = vunpack.c.h.b16 %v339
        %v725 = vunpack.c.l.b16 %v340
        %v726 = vunpack.c.h.b16 %v340
        %v727 = vunpack.c.l.b16 %v341
        %v728 = vunpack.c.h.b16 %v341
        %v729 = vunpack.c.l.b16 %v342
        %v730 = vunpack.c.h.b16 %v342
        %v731 = vunpack.c.l.b16 %v343
        %v732 = vunpack.c.h.b16 %v343
        %v733 = vunpack.c.l.b16 %v344
        %v734 = vunpack.c.h.b16 %v344
        %v735 = vunpack.c.l.b16 %v345
        %v736 = vunpack.c.h.b16 %v345
        %v737 = vunpack.c.l.b16 %v346
        %v738 = vunpack.c.h.b16 %v346
        %v739 = vunpack.c.l.b16 %v347
        %v740 = vunpack.c.h.b16 %v347
        %v741 = vunpack.c.l.b16 %v348
        %v742 = vunpack.c.h.b16 %v348
        %v743 = vunpack.c.l.b16 %v349
        %v744 = vunpack.c.h.b16 %v349
        %v745 = vunpack.c.l.b16 %v350
        %v746 = vunpack.c.h.b16 %v350
        %v747 = vunpack.c.l.b16 %v351
        %v748 = vunpack.c.h.b16 %v351
        %v749 = vunpack.c.l.b16 %v352
        %v750 = vunpack.c.h.b16 %v352
        %v751 = vunpack.c.l.b16 %v353
        %v752 = vunpack.c.h.b16 %v353
        %v753 = vunpack.c.l.b16 %v354
        %v754 = vunpack.c.h.b16 %v354
        %v755 = vunpack.c.l.b16 %v355
        %v756 = vunpack.c.h.b16 %v355
        %v757 = vunpack.c.l.b16 %v356
        %v758 = vunpack.c.h.b16 %v356
        %v759 = vunpack.c.l.b16 %v357
        %v760 = vunpack.c.h.b16 %v357
        %v761 = vunpack.c.l.b16 %v358
        %v762 = vunpack.c.h.b16 %v358
        %v763 = vunpack.c.l.b16 %v359
        %v764 = vunpack.c.h.b16 %v359
        %v765 = vunpack.c.l.b16 %v360
        %v766 = vunpack.c.h.b16 %v360
        %v767 = vunpack.c.l.b16 %v361
        %v768 = vunpack.c.h.b16 %v361
        %v769 = vunpack.c.l.b16 %v362
        %v770 = vunpack.c.h.b16 %v362
        %v771 = vunpack.c.l.b16 %v363
        %v772 = vunpack.c.h.b16 %v363
        %v773 = vunpack.c.l.b16 %v364
        %v774 = vunpack.c.h.b16 %v364
        %v775 = vunpack.c.l.b16 %v365
        %v776 = vunpack.c.h.b16 %v365
        %v777 = vunpack.c.l.b16 %v366
        %v778 = vunpack.c.h.b16 %v366
        %v779 = vunpack.c.l.b16 %v367
        %v780 = vunpack.c.h.b16 %v367
        %v781 = vunpack.c.l.b16 %v368
        %v782 = vunpack.c.h.b16 %v368
        %v783 = vunpack.c.l.b16 %v369
        %v784 = vunpack.c.h.b16 %v369
        %v785 = vunpack.c.l.b16 %v370
        %v786 = vunpack.c.h.b16 %v370
        %v787 = vunpack.c.l.b16 %v371
        %v788 = vunpack.c.h.b16 %v371
        %v789 = vunpack.c.l.b16 %v372
        %v790 = vunpack.c.h.b16 %v372
        %v791 = vunpack.c.l.b16 %v373
        %v792 = vunpack.c.h.b16 %v373
        %v793 = vunpack.c.l.b16 %v374
        %v794 = vunpack.c.h.b16 %v374
        %v795 = vunpack.c.l.b16 %v375
        %v796 = vunpack.c.h.b16 %v375
        %v797 = vunpack.c.l.b16 %v376
        %v798 = vunpack.c.h.b16 %v376
        %v799 = vunpack.c.l.b16 %v377
        %v800 = vunpack.c.h.b16 %v377
        %v801 = vunpack.c.l.b16 %v378
        %v802 = vunpack.c.h.b16 %v378
        %v803 = vunpack.c.l.b16 %v379
        %v804 = vunpack.c.h.b16 %v379
        %v805 = vunpack.c.l.b16 %v380
        %v806 = vunpack.c.h.b16 %v380
        %v807 = vunpack.c.l.b16 %v381
        %v808 = vunpack.c.h.b16 %v381
        %v809 = vunpack.c.l.b16 %v382
        %v810 = vunpack.c.h.b16 %v382
        %v811 = vunpack.c.l.b16 %v383
        %v812 = vunpack.c.h.b16 %v383
        %v813 = vunpack.c.l.b16 %v384
        %v814 = vunpack.c.h.b16 %v384
        %v815 = vunpack.c.l.b16 %v385
        %v816 = vunpack.c.h.b16 %v385
        %v817 = vunpack.c.l.b16 %v386
        %v818 = vunpack.c.h.b16 %v386
        %v819 = vunpack.c.l.b16 %v387
        %v820 = vunpack.c.h.b16 %v387
        %v821 = vunpack.c.l.b16 %v388
        %v822 = vunpack.c.h.b16 %v388
        %v823 = vunpack.c.l.b16 %v389
        %v824 = vunpack.c.h.b16 %v389
        %v825 = vunpack.c.l.b16 %v390
        %v826 = vunpack.c.h.b16 %v390
        %v827 = vunpack.c.l.b16 %v391
        %v828 = vunpack.c.h.b16 %v391
        %v829 = vunpack.c.l.b16 %v392
        %v830 = vunpack.c.h.b16 %v392
        %v831 = vunpack.c.l.b16 %v393
        %v832 = vunpack.c.h.b16 %v393
        %v833 = vunpack.c.l.b16 %v394
        %v834 = vunpack.c.h.b16 %v394
        %v835 = vunpack.c.l.b16 %v395
        %v836 = vunpack.c.h.b16 %v395
        %v837 = vunpack.c.l.b16 %v396
        %v838 = vunpack.c.h.b16 %v396
        %v839 = vunpack.c.l.b16 %v397
        %v840 = vunpack.c.h.b16 %v397
        %v841 = vunpack.c.l.b16 %v398
        %v842 = vunpack.c.h.b16 %v398
        %v843 = vunpack.c.l.b16 %v399
        %v844 = vunpack.c.h.b16 %v399
        %v845 = vunpack.c.l.b16 %v400
        %v846 = vunpack.c.h.b16 %v400
        %v847 = vunpack.c.l.b16 %v401
        %v848 = vunpack.c.h.b16 %v401
        %v849 = vunpack.c.l.b16 %v402
        %v850 = vunpack.c.h.b16 %v402
        %v851 = vunpack.c.l.b16 %v403
        %v852 = vunpack.c.h.b16 %v403
        %v853 = vunpack.c.l.b16 %v404
        %v854 = vunpack.c.h.b16 %v404
        %v855 = vunpack.c.l.b16 %v405
        %v856 = vunpack.c.h.b16 %v405
        %v857 = vunpack.c.l.b16 %v406
        %v858 = vunpack.c.h.b16 %v406
        %v859 = vunpack.c.l.b16 %v407
        %v860 = vunpack.c.h.b16 %v407
        %v861 = vunpack.c.l.b16 %v408
        %v862 = vunpack.c.h.b16 %v408
        %v863 = vunpack.c.l.b16 %v409
        %v864 = vunpack.c.h.b16 %v409
        %v865 = vunpack.c.l.b16 %v410
        %v866 = vunpack.c.h.b16 %v410
        %v867 = vunpack.c.l.b16 %v411
        %v868 = vunpack.c.h.b16 %v411
        %v869 = vunpack.c.l.b16 %v412
        %v870 = vunpack.c.h.b16 %v412
        %v871 = vunpack.c.l.b16 %v413
        %v872 = vunpack.c.h.b16 %v413
        %v873 = vunpack.c.l.b16 %v414
        %v874 = vunpack.c.h.b16 %v414
        %v875 = vunpack.c.l.b16 %v415
        %v876 = vunpack.c.h.b16 %v415
        %v877 = vunpack.c.l.b16 %v416
        %v878 = vunpack.c.h.b16 %v416
        %v879 = vpack.c.b16 %v719, %v715
        %v880 = vpack.c.b16 %v720, %v716
        %v881 = vpack.c.b16 %v721, %v717
        %v882 = vpack.c.b16 %v722, %v718
        %v883 = vpack.c.b16 %v727, %v723
        %v884 = vpack.c.b16 %v728, %v724
        %v885 = vpack.c.b16 %v729, %v725
        %v886 = vpack.c.b16 %v730, %v726
        %v887 = vpack.c.b16 %v735, %v731
        %v888 = vpack.c.b16 %v736, %v732
        %v889 = vpack.c.b16 %v737, %v733
        %v890 = vpack.c.b16 %v738, %v734
        %v891 = vpack.c.b16 %v743, %v739
        %v892 = vpack.c.b16 %v744, %v740
        %v893 = vpack.c.b16 %v745, %v741
        %v894 = vpack.c.b16 %v746, %v742
        %v895 = vpack.c.b16 %v751, %v747
        %v896 = vpack.c.b16 %v752, %v748
        %v897 = vpack.c.b16 %v753, %v749
        %v898 = vpack.c.b16 %v754, %v750
        %v899 = vpack.c.b16 %v759, %v755
        %v900 = vpack.c.b16 %v760, %v756
        %v901 = vpack.c.b16 %v761, %v757
        %v902 = vpack.c.b16 %v762, %v758
        %v903 = vpack.c.b16 %v767, %v763
        %v904 = vpack.c.b16 %v768, %v764
        %v905 = vpack.c.b16 %v769, %v765
        %v906 = vpack.c.b16 %v770, %v766
        %v907 = vpack.c.b16 %v775, %v771
        %v908 = vpack.c.b16 %v776, %v772
        %v909 = vpack.c.b16 %v777, %v773
        %v910 = vpack.c.b16 %v778, %v774
        %v911 = vpack.c.b16 %v783, %v779
        %v912 = vpack.c.b16 %v784, %v780
        %v913 = vpack.c.b16 %v785, %v781
        %v914 = vpack.c.b16 %v786, %v782
        %v915 = vpack.c.b16 %v791, %v787
        %v916 = vpack.c.b16 %v792, %v788
        %v917 = vpack.c.b16 %v793, %v789
        %v918 = vpack.c.b16 %v794, %v790
        %v919 = vpack.c.b16 %v799, %v795
        %v920 = vpack.c.b16 %v800, %v796
        %v921 = vpack.c.b16 %v801, %v797
        %v922 = vpack.c.b16 %v802, %v798
        %v923 = vpack.c.b16 %v807, %v803
        %v924 = vpack.c.b16 %v808, %v804
        %v925 = vpack.c.b16 %v809, %v805
        %v926 = vpack.c.b16 %v810, %v806
        %v927 = vpack.c.b16 %v815, %v811
        %v928 = vpack.c.b16 %v816, %v812
        %v929 = vpack.c.b16 %v817, %v813
        %v930 = vpack.c.b16 %v818, %v814
        %v931 = vpack.c.b16 %v823, %v819
        %v932 = vpack.c.b16 %v824, %v820
        %v933 = vpack.c.b16 %v825, %v821
        %v934 = vpack.c.b16 %v826, %v822
        %v935 = vpack.c.b16 %v831, %v827
        %v936 = vpack.c.b16 %v832, %v828
        %v937 = vpack.c.b16 %v833, %v829
        %v938 = vpack.c.b16 %v834, %v830
        %v939 = vpack.c.b16 %v839, %v835
        %v940 = vpack.c.b16 %v840, %v836
        %v941 = vpack.c.b16 %v841, %v837
        %v942 = vpack.c.b16 %v842, %v838
        %v943 = vpack.c.b16 %v847, %v843
        %v944 = vpack.c.b16 %v848, %v844
        %v945 = vpack.c.b16 %v849, %v845
        %v946 = vpack.c.b16 %v850, %v846
        %v947 = vpack.c.b16 %v855, %v851
        %v948 = vpack.c.b16 %v856, %v852
        %v949 = vpack.c.b16 %v857, %v853
        %v950 = vpack.c.b16 %v858, %v854
        %v951 = vpack.c.b16 %v863, %v859
        %v952 = vpack.c.b16 %v864, %v860
        %v953 = vpack.c.b16 %v865, %v861
        %v954 = vpack.c.b16 %v866, %v862
        %v955 = vpack.c.b16 %v871, %v867
        %v956 = vpack.c.b16 %v872, %v868
        %v957 = vpack.c.b16 %v873, %v869
        %v958 = vpack.c.b16 %v874, %v870
        %v959 = vpack.c.b16 %v875, %v875
        %v960 = vpack.c.b16 %v876, %v876
        %v961 = vpack.c.b16 %v877, %v877
        %v962 = vpack.c.b16 %v878, %v878
        %vm1043 = vcmask 556032
        %v1045 = vsel %vm1043, %v595, 0
        %v1048 = vsel %vm1043, %v598, 0
        %v1051 = vsel %vm1043, %v601, 0
        %v1054 = vsel %vm1043, %v604, 0
        %v1057 = vsel %vm1043, %v607, 0
        %v1060 = vsel %vm1043, %v610, 0
        %v1063 = vsel %vm1043, %v613, 0
        %v1066 = vsel %vm1043, %v616, 0
        %vm1068 = vcmask 1041408
        %v1070 = vsel %vm1068, %v959, 0
        %v1073 = vsel %vm1068, %v960, 0
        %v1076 = vsel %vm1068, %v961, 0
        %v1079 = vsel %vm1068, %v962, 0
        %1081 = vmatpush.bf16.msra.mxu0 %v907
        %1082 = vmatpush.bf16.msra.mxu0 %v903
        %1083 = vmatpush.bf16.msra.mxu0 %v899
        %1084 = vmatpush.bf16.msra.mxu0 %v895
        %1085 = vmatpush.bf16.msra.mxu0 %v891
        %1086 = vmatpush.bf16.msra.mxu0 %v887
        %1087 = vmatpush.bf16.msra.mxu0 %v883
        %1088 = vmatpush.bf16.msra.mxu0 %v879
        %1089 = vmatmul.bf16.gmra.mxu0 %v593
        %v1090 = vpop.f32.mrf.mxu0
        %v1091 = vadd.f32 %v436, %v1090
        %v1092 = vpop.f32.mrf.mxu0
        %v1093 = vadd.f32 %v441, %v1092
        %1094 = vmatmul.bf16.gmra.mxu0 %v596
        %v1095 = vpop.f32.mrf.mxu0
        %v1096 = vadd.f32 %v446, %v1095
        %v1097 = vpop.f32.mrf.mxu0
        %v1098 = vadd.f32 %v451, %v1097
        %1099 = vmatmul.bf16.gmra.mxu0 %v599
        %v1100 = vpop.f32.mrf.mxu0
        %v1101 = vadd.f32 %v456, %v1100
        %v1102 = vpop.f32.mrf.mxu0
        %v1103 = vadd.f32 %v461, %v1102
        %1104 = vmatmul.bf16.gmra.mxu0 %v602
        %v1105 = vpop.f32.mrf.mxu0
        %v1106 = vadd.f32 %v466, %v1105
        %v1107 = vpop.f32.mrf.mxu0
        %v1108 = vadd.f32 %v471, %v1107
        %1109 = vmatmul.bf16.gmra.mxu0 %v605
        %v1110 = vpop.f32.mrf.mxu0
        %v1111 = vadd.f32 %v476, %v1110
        %v1112 = vpop.f32.mrf.mxu0
        %v1113 = vadd.f32 %v481, %v1112
        %1114 = vmatmul.bf16.gmra.mxu0 %v608
        %v1115 = vpop.f32.mrf.mxu0
        %v1116 = vadd.f32 %v486, %v1115
        %v1117 = vpop.f32.mrf.mxu0
        %v1118 = vadd.f32 %v491, %v1117
        %1119 = vmatmul.bf16.gmra.mxu0 %v611
        %v1120 = vpop.f32.mrf.mxu0
        %v1121 = vadd.f32 %v496, %v1120
        %v1122 = vpop.f32.mrf.mxu0
        %v1123 = vadd.f32 %v501, %v1122
        %1124 = vmatmul.bf16.gmra.mxu0 %v614
        %v1125 = vpop.f32.mrf.mxu0
        %v1126 = vadd.f32 %v506, %v1125
        %v1127 = vpop.f32.mrf.mxu0
        %v1128 = vadd.f32 %v511, %v1127
        %1129 = vdwg.mxu0
        %1130 = vmatpush.bf16.msra.mxu0 %v939
        %1131 = vmatpush.bf16.msra.mxu0 %v935
        %1132 = vmatpush.bf16.msra.mxu0 %v931
        %1133 = vmatpush.bf16.msra.mxu0 %v927
        %1134 = vmatpush.bf16.msra.mxu0 %v923
        %1135 = vmatpush.bf16.msra.mxu0 %v919
        %1136 = vmatpush.bf16.msra.mxu0 %v915
        %1137 = vmatpush.bf16.msra.mxu0 %v911
        %1138 = vmatmul.bf16.gmra.mxu0 %v594
        %v1139 = vpop.f32.mrf.mxu0
        %v1140 = vadd.f32 %v1091, %v1139
        %v1141 = vpop.f32.mrf.mxu0
        %v1142 = vadd.f32 %v1093, %v1141
        %1143 = vmatmul.bf16.gmra.mxu0 %v597
        %v1144 = vpop.f32.mrf.mxu0
        %v1145 = vadd.f32 %v1096, %v1144
        %v1146 = vpop.f32.mrf.mxu0
        %v1147 = vadd.f32 %v1098, %v1146
        %1148 = vmatmul.bf16.gmra.mxu0 %v600
        %v1149 = vpop.f32.mrf.mxu0
        %v1150 = vadd.f32 %v1101, %v1149
        %v1151 = vpop.f32.mrf.mxu0
        %v1152 = vadd.f32 %v1103, %v1151
        %1153 = vmatmul.bf16.gmra.mxu0 %v603
        %v1154 = vpop.f32.mrf.mxu0
        %v1155 = vadd.f32 %v1106, %v1154
        %v1156 = vpop.f32.mrf.mxu0
        %v1157 = vadd.f32 %v1108, %v1156
        %1158 = vmatmul.bf16.gmra.mxu0 %v606
        %v1159 = vpop.f32.mrf.mxu0
        %v1160 = vadd.f32 %v1111, %v1159
        %v1161 = vpop.f32.mrf.mxu0
        %v1162 = vadd.f32 %v1113, %v1161
        %1163 = vmatmul.bf16.gmra.mxu0 %v609
        %v1164 = vpop.f32.mrf.mxu0
        %v1165 = vadd.f32 %v1116, %v1164
        %v1166 = vpop.f32.mrf.mxu0
        %v1167 = vadd.f32 %v1118, %v1166
        %1168 = vmatmul.bf16.gmra.mxu0 %v612
        %v1169 = vpop.f32.mrf.mxu0
        %v1170 = vadd.f32 %v1121, %v1169
        %v1171 = vpop.f32.mrf.mxu0
        %v1172 = vadd.f32 %v1123, %v1171
        %1173 = vmatmul.bf16.gmra.mxu0 %v615
        %v1174 = vpop.f32.mrf.mxu0
        %v1175 = vadd.f32 %v1126, %v1174
        %v1176 = vpop.f32.mrf.mxu0
        %v1177 = vadd.f32 %v1128, %v1176
        %1178 = vdwg.mxu0
        %1179 = vmatpush.bf16.msra.mxu0 0
        %1180 = vmatpush.bf16.msra.mxu0 0
        %1181 = vmatpush.bf16.msra.mxu0 0
        %1182 = vmatpush.bf16.msra.mxu0 %v1070
        %1183 = vmatpush.bf16.msra.mxu0 %v955
        %1184 = vmatpush.bf16.msra.mxu0 %v951
        %1185 = vmatpush.bf16.msra.mxu0 %v947
        %1186 = vmatpush.bf16.msra.mxu0 %v943
        %1187 = vmatmul.bf16.gmra.mxu0 %v1045
        %v1188 = vpop.f32.mrf.mxu0
        %v1189 = vadd.f32 %v1140, %v1188
        %v1190 = vpop.f32.mrf.mxu0
        %v1191 = vadd.f32 %v1142, %v1190
        %1192 = vmatmul.bf16.gmra.mxu0 %v1048
        %v1193 = vpop.f32.mrf.mxu0
        %v1194 = vadd.f32 %v1145, %v1193
        %v1195 = vpop.f32.mrf.mxu0
        %v1196 = vadd.f32 %v1147, %v1195
        %1197 = vmatmul.bf16.gmra.mxu0 %v1051
        %v1198 = vpop.f32.mrf.mxu0
        %v1199 = vadd.f32 %v1150, %v1198
        %v1200 = vpop.f32.mrf.mxu0
        %v1201 = vadd.f32 %v1152, %v1200
        %1202 = vmatmul.bf16.gmra.mxu0 %v1054
        %v1203 = vpop.f32.mrf.mxu0
        %v1204 = vadd.f32 %v1155, %v1203
        %v1205 = vpop.f32.mrf.mxu0
        %v1206 = vadd.f32 %v1157, %v1205
        %1207 = vmatmul.bf16.gmra.mxu0 %v1057
        %v1208 = vpop.f32.mrf.mxu0
        %v1209 = vadd.f32 %v1160, %v1208
        %v1210 = vpop.f32.mrf.mxu0
        %v1211 = vadd.f32 %v1162, %v1210
        %1212 = vmatmul.bf16.gmra.mxu0 %v1060
        %v1213 = vpop.f32.mrf.mxu0
        %v1214 = vadd.f32 %v1165, %v1213
        %v1215 = vpop.f32.mrf.mxu0
        %v1216 = vadd.f32 %v1167, %v1215
        %1217 = vmatmul.bf16.gmra.mxu0 %v1063
        %v1218 = vpop.f32.mrf.mxu0
        %v1219 = vadd.f32 %v1170, %v1218
        %v1220 = vpop.f32.mrf.mxu0
        %v1221 = vadd.f32 %v1172, %v1220
        %1222 = vmatmul.bf16.gmra.mxu0 %v1066
        %v1223 = vpop.f32.mrf.mxu0
        %v1224 = vadd.f32 %v1175, %v1223
        %v1225 = vpop.f32.mrf.mxu0
        %v1226 = vadd.f32 %v1177, %v1225
        %1227 = vdwg.mxu0
        %1228 = vmatpush.bf16.msra.mxu0 %v908
        %1229 = vmatpush.bf16.msra.mxu0 %v904
        %1230 = vmatpush.bf16.msra.mxu0 %v900
        %1231 = vmatpush.bf16.msra.mxu0 %v896
        %1232 = vmatpush.bf16.msra.mxu0 %v892
        %1233 = vmatpush.bf16.msra.mxu0 %v888
        %1234 = vmatpush.bf16.msra.mxu0 %v884
        %1235 = vmatpush.bf16.msra.mxu0 %v880
        %1236 = vmatmul.bf16.gmra.mxu0 %v593
        %v1237 = vpop.f32.mrf.mxu0
        %v1238 = vadd.f32 %v436, %v1237
        %v1239 = vpop.f32.mrf.mxu0
        %v1240 = vadd.f32 %v441, %v1239
        %1241 = vmatmul.bf16.gmra.mxu0 %v596
        %v1242 = vpop.f32.mrf.mxu0
        %v1243 = vadd.f32 %v446, %v1242
        %v1244 = vpop.f32.mrf.mxu0
        %v1245 = vadd.f32 %v451, %v1244
        %1246 = vmatmul.bf16.gmra.mxu0 %v599
        %v1247 = vpop.f32.mrf.mxu0
        %v1248 = vadd.f32 %v456, %v1247
        %v1249 = vpop.f32.mrf.mxu0
        %v1250 = vadd.f32 %v461, %v1249
        %1251 = vmatmul.bf16.gmra.mxu0 %v602
        %v1252 = vpop.f32.mrf.mxu0
        %v1253 = vadd.f32 %v466, %v1252
        %v1254 = vpop.f32.mrf.mxu0
        %v1255 = vadd.f32 %v471, %v1254
        %1256 = vmatmul.bf16.gmra.mxu0 %v605
        %v1257 = vpop.f32.mrf.mxu0
        %v1258 = vadd.f32 %v476, %v1257
        %v1259 = vpop.f32.mrf.mxu0
        %v1260 = vadd.f32 %v481, %v1259
        %1261 = vmatmul.bf16.gmra.mxu0 %v608
        %v1262 = vpop.f32.mrf.mxu0
        %v1263 = vadd.f32 %v486, %v1262
        %v1264 = vpop.f32.mrf.mxu0
        %v1265 = vadd.f32 %v491, %v1264
        %1266 = vmatmul.bf16.gmra.mxu0 %v611
        %v1267 = vpop.f32.mrf.mxu0
        %v1268 = vadd.f32 %v496, %v1267
        %v1269 = vpop.f32.mrf.mxu0
        %v1270 = vadd.f32 %v501, %v1269
        %1271 = vmatmul.bf16.gmra.mxu0 %v614
        %v1272 = vpop.f32.mrf.mxu0
        %v1273 = vadd.f32 %v506, %v1272
        %v1274 = vpop.f32.mrf.mxu0
        %v1275 = vadd.f32 %v511, %v1274
        %1276 = vdwg.mxu0
        %1277 = vmatpush.bf16.msra.mxu0 %v940
        %1278 = vmatpush.bf16.msra.mxu0 %v936
        %1279 = vmatpush.bf16.msra.mxu0 %v932
        %1280 = vmatpush.bf16.msra.mxu0 %v928
        %1281 = vmatpush.bf16.msra.mxu0 %v924
        %1282 = vmatpush.bf16.msra.mxu0 %v920
        %1283 = vmatpush.bf16.msra.mxu0 %v916
        %1284 = vmatpush.bf16.msra.mxu0 %v912
        %1285 = vmatmul.bf16.gmra.mxu0 %v594
        %v1286 = vpop.f32.mrf.mxu0
        %v1287 = vadd.f32 %v1238, %v1286
        %v1288 = vpop.f32.mrf.mxu0
        %v1289 = vadd.f32 %v1240, %v1288
        %1290 = vmatmul.bf16.gmra.mxu0 %v597
        %v1291 = vpop.f32.mrf.mxu0
        %v1292 = vadd.f32 %v1243, %v1291
        %v1293 = vpop.f32.mrf.mxu0
        %v1294 = vadd.f32 %v1245, %v1293
        %1295 = vmatmul.bf16.gmra.mxu0 %v600
        %v1296 = vpop.f32.mrf.mxu0
        %v1297 = vadd.f32 %v1248, %v1296
        %v1298 = vpop.f32.mrf.mxu0
        %v1299 = vadd.f32 %v1250, %v1298
        %1300 = vmatmul.bf16.gmra.mxu0 %v603
        %v1301 = vpop.f32.mrf.mxu0
        %v1302 = vadd.f32 %v1253, %v1301
        %v1303 = vpop.f32.mrf.mxu0
        %v1304 = vadd.f32 %v1255, %v1303
        %1305 = vmatmul.bf16.gmra.mxu0 %v606
        %v1306 = vpop.f32.mrf.mxu0
        %v1307 = vadd.f32 %v1258, %v1306
        %v1308 = vpop.f32.mrf.mxu0
        %v1309 = vadd.f32 %v1260, %v1308
        %1310 = vmatmul.bf16.gmra.mxu0 %v609
        %v1311 = vpop.f32.mrf.mxu0
        %v1312 = vadd.f32 %v1263, %v1311
        %v1313 = vpop.f32.mrf.mxu0
        %v1314 = vadd.f32 %v1265, %v1313
        %1315 = vmatmul.bf16.gmra.mxu0 %v612
        %v1316 = vpop.f32.mrf.mxu0
        %v1317 = vadd.f32 %v1268, %v1316
        %v1318 = vpop.f32.mrf.mxu0
        %v1319 = vadd.f32 %v1270, %v1318
        %1320 = vmatmul.bf16.gmra.mxu0 %v615
        %v1321 = vpop.f32.mrf.mxu0
        %v1322 = vadd.f32 %v1273, %v1321
        %v1323 = vpop.f32.mrf.mxu0
        %v1324 = vadd.f32 %v1275, %v1323
        %1325 = vdwg.mxu0
        %1326 = vmatpush.bf16.msra.mxu0 0
        %1327 = vmatpush.bf16.msra.mxu0 0
        %1328 = vmatpush.bf16.msra.mxu0 0
        %1329 = vmatpush.bf16.msra.mxu0 %v1073
        %1330 = vmatpush.bf16.msra.mxu0 %v956
        %1331 = vmatpush.bf16.msra.mxu0 %v952
        %1332 = vmatpush.bf16.msra.mxu0 %v948
        %1333 = vmatpush.bf16.msra.mxu0 %v944
        %1334 = vmatmul.bf16.gmra.mxu0 %v1045
        %v1335 = vpop.f32.mrf.mxu0
        %v1336 = vadd.f32 %v1287, %v1335
        %v1337 = vpop.f32.mrf.mxu0
        %v1338 = vadd.f32 %v1289, %v1337
        %1339 = vmatmul.bf16.gmra.mxu0 %v1048
        %v1340 = vpop.f32.mrf.mxu0
        %v1341 = vadd.f32 %v1292, %v1340
        %v1342 = vpop.f32.mrf.mxu0
        %v1343 = vadd.f32 %v1294, %v1342
        %1344 = vmatmul.bf16.gmra.mxu0 %v1051
        %v1345 = vpop.f32.mrf.mxu0
        %v1346 = vadd.f32 %v1297, %v1345
        %v1347 = vpop.f32.mrf.mxu0
        %v1348 = vadd.f32 %v1299, %v1347
        %1349 = vmatmul.bf16.gmra.mxu0 %v1054
        %v1350 = vpop.f32.mrf.mxu0
        %v1351 = vadd.f32 %v1302, %v1350
        %v1352 = vpop.f32.mrf.mxu0
        %v1353 = vadd.f32 %v1304, %v1352
        %1354 = vmatmul.bf16.gmra.mxu0 %v1057
        %v1355 = vpop.f32.mrf.mxu0
        %v1356 = vadd.f32 %v1307, %v1355
        %v1357 = vpop.f32.mrf.mxu0
        %v1358 = vadd.f32 %v1309, %v1357
        %1359 = vmatmul.bf16.gmra.mxu0 %v1060
        %v1360 = vpop.f32.mrf.mxu0
        %v1361 = vadd.f32 %v1312, %v1360
        %v1362 = vpop.f32.mrf.mxu0
        %v1363 = vadd.f32 %v1314, %v1362
        %1364 = vmatmul.bf16.gmra.mxu0 %v1063
        %v1365 = vpop.f32.mrf.mxu0
        %v1366 = vadd.f32 %v1317, %v1365
        %v1367 = vpop.f32.mrf.mxu0
        %v1368 = vadd.f32 %v1319, %v1367
        %1369 = vmatmul.bf16.gmra.mxu0 %v1066
        %v1370 = vpop.f32.mrf.mxu0
        %v1371 = vadd.f32 %v1322, %v1370
        %v1372 = vpop.f32.mrf.mxu0
        %v1373 = vadd.f32 %v1324, %v1372
        %1374 = vdwg.mxu0
        %1375 = vmatpush.bf16.msra.mxu0 %v909
        %1376 = vmatpush.bf16.msra.mxu0 %v905
        %1377 = vmatpush.bf16.msra.mxu0 %v901
        %1378 = vmatpush.bf16.msra.mxu0 %v897
        %1379 = vmatpush.bf16.msra.mxu0 %v893
        %1380 = vmatpush.bf16.msra.mxu0 %v889
        %1381 = vmatpush.bf16.msra.mxu0 %v885
        %1382 = vmatpush.bf16.msra.mxu0 %v881
        %1383 = vmatmul.bf16.gmra.mxu0 %v593
        %v1384 = vpop.f32.mrf.mxu0
        %v1385 = vadd.f32 %v436, %v1384
        %v1386 = vpop.f32.mrf.mxu0
        %v1387 = vadd.f32 %v441, %v1386
        %1388 = vmatmul.bf16.gmra.mxu0 %v596
        %v1389 = vpop.f32.mrf.mxu0
        %v1390 = vadd.f32 %v446, %v1389
        %v1391 = vpop.f32.mrf.mxu0
        %v1392 = vadd.f32 %v451, %v1391
        %1393 = vmatmul.bf16.gmra.mxu0 %v599
        %v1394 = vpop.f32.mrf.mxu0
        %v1395 = vadd.f32 %v456, %v1394
        %v1396 = vpop.f32.mrf.mxu0
        %v1397 = vadd.f32 %v461, %v1396
        %1398 = vmatmul.bf16.gmra.mxu0 %v602
        %v1399 = vpop.f32.mrf.mxu0
        %v1400 = vadd.f32 %v466, %v1399
        %v1401 = vpop.f32.mrf.mxu0
        %v1402 = vadd.f32 %v471, %v1401
        %1403 = vmatmul.bf16.gmra.mxu0 %v605
        %v1404 = vpop.f32.mrf.mxu0
        %v1405 = vadd.f32 %v476, %v1404
        %v1406 = vpop.f32.mrf.mxu0
        %v1407 = vadd.f32 %v481, %v1406
        %1408 = vmatmul.bf16.gmra.mxu0 %v608
        %v1409 = vpop.f32.mrf.mxu0
        %v1410 = vadd.f32 %v486, %v1409
        %v1411 = vpop.f32.mrf.mxu0
        %v1412 = vadd.f32 %v491, %v1411
        %1413 = vmatmul.bf16.gmra.mxu0 %v611
        %v1414 = vpop.f32.mrf.mxu0
        %v1415 = vadd.f32 %v496, %v1414
        %v1416 = vpop.f32.mrf.mxu0
        %v1417 = vadd.f32 %v501, %v1416
        %1418 = vmatmul.bf16.gmra.mxu0 %v614
        %v1419 = vpop.f32.mrf.mxu0
        %v1420 = vadd.f32 %v506, %v1419
        %v1421 = vpop.f32.mrf.mxu0
        %v1422 = vadd.f32 %v511, %v1421
        %1423 = vdwg.mxu0
        %1424 = vmatpush.bf16.msra.mxu0 %v941
        %1425 = vmatpush.bf16.msra.mxu0 %v937
        %1426 = vmatpush.bf16.msra.mxu0 %v933
        %1427 = vmatpush.bf16.msra.mxu0 %v929
        %1428 = vmatpush.bf16.msra.mxu0 %v925
        %1429 = vmatpush.bf16.msra.mxu0 %v921
        %1430 = vmatpush.bf16.msra.mxu0 %v917
        %1431 = vmatpush.bf16.msra.mxu0 %v913
        %1432 = vmatmul.bf16.gmra.mxu0 %v594
        %v1433 = vpop.f32.mrf.mxu0
        %v1434 = vadd.f32 %v1385, %v1433
        %v1435 = vpop.f32.mrf.mxu0
        %v1436 = vadd.f32 %v1387, %v1435
        %1437 = vmatmul.bf16.gmra.mxu0 %v597
        %v1438 = vpop.f32.mrf.mxu0
        %v1439 = vadd.f32 %v1390, %v1438
        %v1440 = vpop.f32.mrf.mxu0
        %v1441 = vadd.f32 %v1392, %v1440
        %1442 = vmatmul.bf16.gmra.mxu0 %v600
        %v1443 = vpop.f32.mrf.mxu0
        %v1444 = vadd.f32 %v1395, %v1443
        %v1445 = vpop.f32.mrf.mxu0
        %v1446 = vadd.f32 %v1397, %v1445
        %1447 = vmatmul.bf16.gmra.mxu0 %v603
        %v1448 = vpop.f32.mrf.mxu0
        %v1449 = vadd.f32 %v1400, %v1448
        %v1450 = vpop.f32.mrf.mxu0
        %v1451 = vadd.f32 %v1402, %v1450
        %1452 = vmatmul.bf16.gmra.mxu0 %v606
        %v1453 = vpop.f32.mrf.mxu0
        %v1454 = vadd.f32 %v1405, %v1453
        %v1455 = vpop.f32.mrf.mxu0
        %v1456 = vadd.f32 %v1407, %v1455
        %1457 = vmatmul.bf16.gmra.mxu0 %v609
        %v1458 = vpop.f32.mrf.mxu0
        %v1459 = vadd.f32 %v1410, %v1458
        %v1460 = vpop.f32.mrf.mxu0
        %v1461 = vadd.f32 %v1412, %v1460
        %1462 = vmatmul.bf16.gmra.mxu0 %v612
        %v1463 = vpop.f32.mrf.mxu0
        %v1464 = vadd.f32 %v1415, %v1463
        %v1465 = vpop.f32.mrf.mxu0
        %v1466 = vadd.f32 %v1417, %v1465
        %1467 = vmatmul.bf16.gmra.mxu0 %v615
        %v1468 = vpop.f32.mrf.mxu0
        %v1469 = vadd.f32 %v1420, %v1468
        %v1470 = vpop.f32.mrf.mxu0
        %v1471 = vadd.f32 %v1422, %v1470
        %1472 = vdwg.mxu0
        %1473 = vmatpush.bf16.msra.mxu0 0
        %1474 = vmatpush.bf16.msra.mxu0 0
        %1475 = vmatpush.bf16.msra.mxu0 0
        %1476 = vmatpush.bf16.msra.mxu0 %v1076
        %1477 = vmatpush.bf16.msra.mxu0 %v957
        %1478 = vmatpush.bf16.msra.mxu0 %v953
        %1479 = vmatpush.bf16.msra.mxu0 %v949
        %1480 = vmatpush.bf16.msra.mxu0 %v945
        %1481 = vmatmul.bf16.gmra.mxu0 %v1045
        %v1482 = vpop.f32.mrf.mxu0
        %v1483 = vadd.f32 %v1434, %v1482
        %v1484 = vpop.f32.mrf.mxu0
        %v1485 = vadd.f32 %v1436, %v1484
        %1486 = vmatmul.bf16.gmra.mxu0 %v1048
        %v1487 = vpop.f32.mrf.mxu0
        %v1488 = vadd.f32 %v1439, %v1487
        %v1489 = vpop.f32.mrf.mxu0
        %v1490 = vadd.f32 %v1441, %v1489
        %1491 = vmatmul.bf16.gmra.mxu0 %v1051
        %v1492 = vpop.f32.mrf.mxu0
        %v1493 = vadd.f32 %v1444, %v1492
        %v1494 = vpop.f32.mrf.mxu0
        %v1495 = vadd.f32 %v1446, %v1494
        %1496 = vmatmul.bf16.gmra.mxu0 %v1054
        %v1497 = vpop.f32.mrf.mxu0
        %v1498 = vadd.f32 %v1449, %v1497
        %v1499 = vpop.f32.mrf.mxu0
        %v1500 = vadd.f32 %v1451, %v1499
        %1501 = vmatmul.bf16.gmra.mxu0 %v1057
        %v1502 = vpop.f32.mrf.mxu0
        %v1503 = vadd.f32 %v1454, %v1502
        %v1504 = vpop.f32.mrf.mxu0
        %v1505 = vadd.f32 %v1456, %v1504
        %1506 = vmatmul.bf16.gmra.mxu0 %v1060
        %v1507 = vpop.f32.mrf.mxu0
        %v1508 = vadd.f32 %v1459, %v1507
        %v1509 = vpop.f32.mrf.mxu0
        %v1510 = vadd.f32 %v1461, %v1509
        %1511 = vmatmul.bf16.gmra.mxu0 %v1063
        %v1512 = vpop.f32.mrf.mxu0
        %v1513 = vadd.f32 %v1464, %v1512
        %v1514 = vpop.f32.mrf.mxu0
        %v1515 = vadd.f32 %v1466, %v1514
        %1516 = vmatmul.bf16.gmra.mxu0 %v1066
        %v1517 = vpop.f32.mrf.mxu0
        %v1518 = vadd.f32 %v1469, %v1517
        %v1519 = vpop.f32.mrf.mxu0
        %v1520 = vadd.f32 %v1471, %v1519
        %1521 = vdwg.mxu0
        %1522 = vmatpush.bf16.msra.mxu0 %v910
        %1523 = vmatpush.bf16.msra.mxu0 %v906
        %1524 = vmatpush.bf16.msra.mxu0 %v902
        %1525 = vmatpush.bf16.msra.mxu0 %v898
        %1526 = vmatpush.bf16.msra.mxu0 %v894
        %1527 = vmatpush.bf16.msra.mxu0 %v890
        %1528 = vmatpush.bf16.msra.mxu0 %v886
        %1529 = vmatpush.bf16.msra.mxu0 %v882
        %1530 = vmatmul.bf16.gmra.mxu0 %v593
        %v1531 = vpop.f32.mrf.mxu0
        %v1532 = vadd.f32 %v436, %v1531
        %v1533 = vpop.f32.mrf.mxu0
        %v1534 = vadd.f32 %v441, %v1533
        %1535 = vmatmul.bf16.gmra.mxu0 %v596
        %v1536 = vpop.f32.mrf.mxu0
        %v1537 = vadd.f32 %v446, %v1536
        %v1538 = vpop.f32.mrf.mxu0
        %v1539 = vadd.f32 %v451, %v1538
        %1540 = vmatmul.bf16.gmra.mxu0 %v599
        %v1541 = vpop.f32.mrf.mxu0
        %v1542 = vadd.f32 %v456, %v1541
        %v1543 = vpop.f32.mrf.mxu0
        %v1544 = vadd.f32 %v461, %v1543
        %1545 = vmatmul.bf16.gmra.mxu0 %v602
        %v1546 = vpop.f32.mrf.mxu0
        %v1547 = vadd.f32 %v466, %v1546
        %v1548 = vpop.f32.mrf.mxu0
        %v1549 = vadd.f32 %v471, %v1548
        %1550 = vmatmul.bf16.gmra.mxu0 %v605
        %v1551 = vpop.f32.mrf.mxu0
        %v1552 = vadd.f32 %v476, %v1551
        %v1553 = vpop.f32.mrf.mxu0
        %v1554 = vadd.f32 %v481, %v1553
        %1555 = vmatmul.bf16.gmra.mxu0 %v608
        %v1556 = vpop.f32.mrf.mxu0
        %v1557 = vadd.f32 %v486, %v1556
        %v1558 = vpop.f32.mrf.mxu0
        %v1559 = vadd.f32 %v491, %v1558
        %1560 = vmatmul.bf16.gmra.mxu0 %v611
        %v1561 = vpop.f32.mrf.mxu0
        %v1562 = vadd.f32 %v496, %v1561
        %v1563 = vpop.f32.mrf.mxu0
        %v1564 = vadd.f32 %v501, %v1563
        %1565 = vmatmul.bf16.gmra.mxu0 %v614
        %v1566 = vpop.f32.mrf.mxu0
        %v1567 = vadd.f32 %v506, %v1566
        %v1568 = vpop.f32.mrf.mxu0
        %v1569 = vadd.f32 %v511, %v1568
        %1570 = vdwg.mxu0
        %1571 = vmatpush.bf16.msra.mxu0 %v942
        %1572 = vmatpush.bf16.msra.mxu0 %v938
        %1573 = vmatpush.bf16.msra.mxu0 %v934
        %1574 = vmatpush.bf16.msra.mxu0 %v930
        %1575 = vmatpush.bf16.msra.mxu0 %v926
        %1576 = vmatpush.bf16.msra.mxu0 %v922
        %1577 = vmatpush.bf16.msra.mxu0 %v918
        %1578 = vmatpush.bf16.msra.mxu0 %v914
        %1579 = vmatmul.bf16.gmra.mxu0 %v594
        %v1580 = vpop.f32.mrf.mxu0
        %v1581 = vadd.f32 %v1532, %v1580
        %v1582 = vpop.f32.mrf.mxu0
        %v1583 = vadd.f32 %v1534, %v1582
        %1584 = vmatmul.bf16.gmra.mxu0 %v597
        %v1585 = vpop.f32.mrf.mxu0
        %v1586 = vadd.f32 %v1537, %v1585
        %v1587 = vpop.f32.mrf.mxu0
        %v1588 = vadd.f32 %v1539, %v1587
        %1589 = vmatmul.bf16.gmra.mxu0 %v600
        %v1590 = vpop.f32.mrf.mxu0
        %v1591 = vadd.f32 %v1542, %v1590
        %v1592 = vpop.f32.mrf.mxu0
        %v1593 = vadd.f32 %v1544, %v1592
        %1594 = vmatmul.bf16.gmra.mxu0 %v603
        %v1595 = vpop.f32.mrf.mxu0
        %v1596 = vadd.f32 %v1547, %v1595
        %v1597 = vpop.f32.mrf.mxu0
        %v1598 = vadd.f32 %v1549, %v1597
        %1599 = vmatmul.bf16.gmra.mxu0 %v606
        %v1600 = vpop.f32.mrf.mxu0
        %v1601 = vadd.f32 %v1552, %v1600
        %v1602 = vpop.f32.mrf.mxu0
        %v1603 = vadd.f32 %v1554, %v1602
        %1604 = vmatmul.bf16.gmra.mxu0 %v609
        %v1605 = vpop.f32.mrf.mxu0
        %v1606 = vadd.f32 %v1557, %v1605
        %v1607 = vpop.f32.mrf.mxu0
        %v1608 = vadd.f32 %v1559, %v1607
        %1609 = vmatmul.bf16.gmra.mxu0 %v612
        %v1610 = vpop.f32.mrf.mxu0
        %v1611 = vadd.f32 %v1562, %v1610
        %v1612 = vpop.f32.mrf.mxu0
        %v1613 = vadd.f32 %v1564, %v1612
        %1614 = vmatmul.bf16.gmra.mxu0 %v615
        %v1615 = vpop.f32.mrf.mxu0
        %v1616 = vadd.f32 %v1567, %v1615
        %v1617 = vpop.f32.mrf.mxu0
        %v1618 = vadd.f32 %v1569, %v1617
        %1619 = vdwg.mxu0
        %1620 = vmatpush.bf16.msra.mxu0 0
        %1621 = vmatpush.bf16.msra.mxu0 0
        %1622 = vmatpush.bf16.msra.mxu0 0
        %1623 = vmatpush.bf16.msra.mxu0 %v1079
        %1624 = vmatpush.bf16.msra.mxu0 %v958
        %1625 = vmatpush.bf16.msra.mxu0 %v954
        %1626 = vmatpush.bf16.msra.mxu0 %v950
        %1627 = vmatpush.bf16.msra.mxu0 %v946
        %1628 = vmatmul.bf16.gmra.mxu0 %v1045
        %v1629 = vpop.f32.mrf.mxu0
        %v1630 = vadd.f32 %v1581, %v1629
        %v1631 = vpop.f32.mrf.mxu0
        %v1632 = vadd.f32 %v1583, %v1631
        %1633 = vmatmul.bf16.gmra.mxu0 %v1048
        %v1634 = vpop.f32.mrf.mxu0
        %v1635 = vadd.f32 %v1586, %v1634
        %v1636 = vpop.f32.mrf.mxu0
        %v1637 = vadd.f32 %v1588, %v1636
        %1638 = vmatmul.bf16.gmra.mxu0 %v1051
        %v1639 = vpop.f32.mrf.mxu0
        %v1640 = vadd.f32 %v1591, %v1639
        %v1641 = vpop.f32.mrf.mxu0
        %v1642 = vadd.f32 %v1593, %v1641
        %1643 = vmatmul.bf16.gmra.mxu0 %v1054
        %v1644 = vpop.f32.mrf.mxu0
        %v1645 = vadd.f32 %v1596, %v1644
        %v1646 = vpop.f32.mrf.mxu0
        %v1647 = vadd.f32 %v1598, %v1646
        %1648 = vmatmul.bf16.gmra.mxu0 %v1057
        %v1649 = vpop.f32.mrf.mxu0
        %v1650 = vadd.f32 %v1601, %v1649
        %v1651 = vpop.f32.mrf.mxu0
        %v1652 = vadd.f32 %v1603, %v1651
        %1653 = vmatmul.bf16.gmra.mxu0 %v1060
        %v1654 = vpop.f32.mrf.mxu0
        %v1655 = vadd.f32 %v1606, %v1654
        %v1656 = vpop.f32.mrf.mxu0
        %v1657 = vadd.f32 %v1608, %v1656
        %1658 = vmatmul.bf16.gmra.mxu0 %v1063
        %v1659 = vpop.f32.mrf.mxu0
        %v1660 = vadd.f32 %v1611, %v1659
        %v1661 = vpop.f32.mrf.mxu0
        %v1662 = vadd.f32 %v1613, %v1661
        %1663 = vmatmul.bf16.gmra.mxu0 %v1066
        %v1664 = vpop.f32.mrf.mxu0
        %v1665 = vadd.f32 %v1616, %v1664
        %v1666 = vpop.f32.mrf.mxu0
        %v1667 = vadd.f32 %v1618, %v1666
        %1668 = vdwg.mxu0
        %v1669 = vld [vmem:[%s260] sm:$0xff]
        %v1670 = vld [vmem:[%s260 + $0x8] sm:$0xff]
        %v1671 = vld [vmem:[%s260 + $0x10] sm:$0xff]
        %v1672 = vld [vmem:[%s260 + $0x18] sm:$0xff]
        %v1673 = vld [vmem:[%s260 + $0x20] sm:$0xff]
        %v1674 = vld [vmem:[%s260 + $0x28] sm:$0xff]
        %v1675 = vld [vmem:[%s260 + $0x30] sm:$0xff]
        %v1676 = vld [vmem:[%s260 + $0x38] sm:$0xff]
        %v1677 = vld [vmem:[%s260 + $0x40] sm:$0xff]
        %v1678 = vld [vmem:[%s260 + $0x48] sm:$0xff]
        %v1679 = vld [vmem:[%s260 + $0x50] sm:$0xff]
        %v1680 = vld [vmem:[%s260 + $0x58] sm:$0xff]
        %v1681 = vld [vmem:[%s260 + $0x60] sm:$0xff]
        %v1682 = vld [vmem:[%s260 + $0x68] sm:$0xff]
        %v1683 = vld [vmem:[%s260 + $0x70] sm:$0xff]
        %v1684 = vld [vmem:[%s260 + $0x78] sm:$0xff]
        %v1685 = vxor.u32 %v1189, 2147483648
        %v1686 = vxor.u32 %v1336, 2147483648
        %v1687 = vxor.u32 %v1483, 2147483648
        %v1688 = vxor.u32 %v1630, 2147483648
        %v1689 = vxor.u32 %v1191, 2147483648
        %v1690 = vxor.u32 %v1338, 2147483648
        %v1691 = vxor.u32 %v1485, 2147483648
        %v1692 = vxor.u32 %v1632, 2147483648
        %v1693 = vxor.u32 %v1194, 2147483648
        %v1694 = vxor.u32 %v1341, 2147483648
        %v1695 = vxor.u32 %v1488, 2147483648
        %v1696 = vxor.u32 %v1635, 2147483648
        %v1697 = vxor.u32 %v1196, 2147483648
        %v1698 = vxor.u32 %v1343, 2147483648
        %v1699 = vxor.u32 %v1490, 2147483648
        %v1700 = vxor.u32 %v1637, 2147483648
        %v1701 = vmul.f32 %v1685, 1.442695
        %v1702 = vpow.pop %v1701
        %v1703 = vmul.f32 %v1686, 1.442695
        %v1704 = vpow.pop %v1703
        %v1705 = vmul.f32 %v1687, 1.442695
        %v1706 = vpow.pop %v1705
        %v1707 = vmul.f32 %v1688, 1.442695
        %v1708 = vpow.pop %v1707
        %v1709 = vmul.f32 %v1689, 1.442695
        %v1710 = vpow.pop %v1709
        %v1711 = vmul.f32 %v1690, 1.442695
        %v1712 = vpow.pop %v1711
        %v1713 = vmul.f32 %v1691, 1.442695
        %v1714 = vpow.pop %v1713
        %v1715 = vmul.f32 %v1692, 1.442695
        %v1716 = vpow.pop %v1715
        %v1717 = vmul.f32 %v1693, 1.442695
        %v1718 = vpow.pop %v1717
        %v1719 = vmul.f32 %v1694, 1.442695
        %v1720 = vpow.pop %v1719
        %v1721 = vmul.f32 %v1695, 1.442695
        %v1722 = vpow.pop %v1721
        %v1723 = vmul.f32 %v1696, 1.442695
        %v1724 = vpow.pop %v1723
        %v1725 = vmul.f32 %v1697, 1.442695
        %v1726 = vpow.pop %v1725
        %v1727 = vmul.f32 %v1698, 1.442695
        %v1728 = vpow.pop %v1727
        %v1729 = vmul.f32 %v1699, 1.442695
        %v1730 = vpow.pop %v1729
        %v1731 = vmul.f32 %v1700, 1.442695
        %v1732 = vpow.pop %v1731
        %v1733 = vadd.f32 %v1702, 1.0
        %v1734 = vadd.f32 %v1704, 1.0
        %v1735 = vadd.f32 %v1706, 1.0
        %v1736 = vadd.f32 %v1708, 1.0
        %v1737 = vadd.f32 %v1710, 1.0
        %v1738 = vadd.f32 %v1712, 1.0
        %v1739 = vadd.f32 %v1714, 1.0
        %v1740 = vadd.f32 %v1716, 1.0
        %v1741 = vadd.f32 %v1718, 1.0
        %v1742 = vadd.f32 %v1720, 1.0
        %v1743 = vadd.f32 %v1722, 1.0
        %v1744 = vadd.f32 %v1724, 1.0
        %v1745 = vadd.f32 %v1726, 1.0
        %v1746 = vadd.f32 %v1728, 1.0
        %v1747 = vadd.f32 %v1730, 1.0
        %v1748 = vadd.f32 %v1732, 1.0
        %v1749 = vrcp.pop %v1733
        %v1750 = vmul.f32 %v1733, %v1749
        %v1751 = vsub.f32 1.0, %v1750
        %v1752 = vmul.f32 %v1749, %v1751
        %v1753 = vadd.f32 %v1749, %v1752
        %vm1754 = vweird.f32 %v1733
        %vm1755 = vweird.f32 %v1749
        %vm1756 = vmor %vm1754, %vm1755
        %v1757 = vsel %vm1756, %v1749, %v1753
        %v1758 = vand.u32 2147483647, %v1733
        %vm1759 = vcmp.eq.f32.partialorder %v1758, 8.507059e+37
        %v1760 = vand.u32 %v1733, 2147483648
        %v1761 = vor.u32 1.1754944e-38, %v1760
        %v1762 = vsel %vm1759, %v1761, %v1757
        %v1763 = vmul.f32 1.0, %v1762
        %v1764 = vrcp.pop %v1734
        %v1765 = vmul.f32 %v1734, %v1764
        %v1766 = vsub.f32 1.0, %v1765
        %v1767 = vmul.f32 %v1764, %v1766
        %v1768 = vadd.f32 %v1764, %v1767
        %vm1769 = vweird.f32 %v1734
        %vm1770 = vweird.f32 %v1764
        %vm1771 = vmor %vm1769, %vm1770
        %v1772 = vsel %vm1771, %v1764, %v1768
        %v1773 = vand.u32 2147483647, %v1734
        %vm1774 = vcmp.eq.f32.partialorder %v1773, 8.507059e+37
        %v1775 = vand.u32 %v1734, 2147483648
        %v1776 = vor.u32 1.1754944e-38, %v1775
        %v1777 = vsel %vm1774, %v1776, %v1772
        %v1778 = vmul.f32 1.0, %v1777
        %v1779 = vrcp.pop %v1735
        %v1780 = vmul.f32 %v1735, %v1779
        %v1781 = vsub.f32 1.0, %v1780
        %v1782 = vmul.f32 %v1779, %v1781
        %v1783 = vadd.f32 %v1779, %v1782
        %vm1784 = vweird.f32 %v1735
        %vm1785 = vweird.f32 %v1779
        %vm1786 = vmor %vm1784, %vm1785
        %v1787 = vsel %vm1786, %v1779, %v1783
        %v1788 = vand.u32 2147483647, %v1735
        %vm1789 = vcmp.eq.f32.partialorder %v1788, 8.507059e+37
        %v1790 = vand.u32 %v1735, 2147483648
        %v1791 = vor.u32 1.1754944e-38, %v1790
        %v1792 = vsel %vm1789, %v1791, %v1787
        %v1793 = vmul.f32 1.0, %v1792
        %v1794 = vrcp.pop %v1736
        %v1795 = vmul.f32 %v1736, %v1794
        %v1796 = vsub.f32 1.0, %v1795
        %v1797 = vmul.f32 %v1794, %v1796
        %v1798 = vadd.f32 %v1794, %v1797
        %vm1799 = vweird.f32 %v1736
        %vm1800 = vweird.f32 %v1794
        %vm1801 = vmor %vm1799, %vm1800
        %v1802 = vsel %vm1801, %v1794, %v1798
        %v1803 = vand.u32 2147483647, %v1736
        %vm1804 = vcmp.eq.f32.partialorder %v1803, 8.507059e+37
        %v1805 = vand.u32 %v1736, 2147483648
        %v1806 = vor.u32 1.1754944e-38, %v1805
        %v1807 = vsel %vm1804, %v1806, %v1802
        %v1808 = vmul.f32 1.0, %v1807
        %v1809 = vrcp.pop %v1737
        %v1810 = vmul.f32 %v1737, %v1809
        %v1811 = vsub.f32 1.0, %v1810
        %v1812 = vmul.f32 %v1809, %v1811
        %v1813 = vadd.f32 %v1809, %v1812
        %vm1814 = vweird.f32 %v1737
        %vm1815 = vweird.f32 %v1809
        %vm1816 = vmor %vm1814, %vm1815
        %v1817 = vsel %vm1816, %v1809, %v1813
        %v1818 = vand.u32 2147483647, %v1737
        %vm1819 = vcmp.eq.f32.partialorder %v1818, 8.507059e+37
        %v1820 = vand.u32 %v1737, 2147483648
        %v1821 = vor.u32 1.1754944e-38, %v1820
        %v1822 = vsel %vm1819, %v1821, %v1817
        %v1823 = vmul.f32 1.0, %v1822
        %v1824 = vrcp.pop %v1738
        %v1825 = vmul.f32 %v1738, %v1824
        %v1826 = vsub.f32 1.0, %v1825
        %v1827 = vmul.f32 %v1824, %v1826
        %v1828 = vadd.f32 %v1824, %v1827
        %vm1829 = vweird.f32 %v1738
        %vm1830 = vweird.f32 %v1824
        %vm1831 = vmor %vm1829, %vm1830
        %v1832 = vsel %vm1831, %v1824, %v1828
        %v1833 = vand.u32 2147483647, %v1738
        %vm1834 = vcmp.eq.f32.partialorder %v1833, 8.507059e+37
        %v1835 = vand.u32 %v1738, 2147483648
        %v1836 = vor.u32 1.1754944e-38, %v1835
        %v1837 = vsel %vm1834, %v1836, %v1832
        %v1838 = vmul.f32 1.0, %v1837
        %v1839 = vrcp.pop %v1739
        %v1840 = vmul.f32 %v1739, %v1839
        %v1841 = vsub.f32 1.0, %v1840
        %v1842 = vmul.f32 %v1839, %v1841
        %v1843 = vadd.f32 %v1839, %v1842
        %vm1844 = vweird.f32 %v1739
        %vm1845 = vweird.f32 %v1839
        %vm1846 = vmor %vm1844, %vm1845
        %v1847 = vsel %vm1846, %v1839, %v1843
        %v1848 = vand.u32 2147483647, %v1739
        %vm1849 = vcmp.eq.f32.partialorder %v1848, 8.507059e+37
        %v1850 = vand.u32 %v1739, 2147483648
        %v1851 = vor.u32 1.1754944e-38, %v1850
        %v1852 = vsel %vm1849, %v1851, %v1847
        %v1853 = vmul.f32 1.0, %v1852
        %v1854 = vrcp.pop %v1740
        %v1855 = vmul.f32 %v1740, %v1854
        %v1856 = vsub.f32 1.0, %v1855
        %v1857 = vmul.f32 %v1854, %v1856
        %v1858 = vadd.f32 %v1854, %v1857
        %vm1859 = vweird.f32 %v1740
        %vm1860 = vweird.f32 %v1854
        %vm1861 = vmor %vm1859, %vm1860
        %v1862 = vsel %vm1861, %v1854, %v1858
        %v1863 = vand.u32 2147483647, %v1740
        %vm1864 = vcmp.eq.f32.partialorder %v1863, 8.507059e+37
        %v1865 = vand.u32 %v1740, 2147483648
        %v1866 = vor.u32 1.1754944e-38, %v1865
        %v1867 = vsel %vm1864, %v1866, %v1862
        %v1868 = vmul.f32 1.0, %v1867
        %v1869 = vrcp.pop %v1741
        %v1870 = vmul.f32 %v1741, %v1869
        %v1871 = vsub.f32 1.0, %v1870
        %v1872 = vmul.f32 %v1869, %v1871
        %v1873 = vadd.f32 %v1869, %v1872
        %vm1874 = vweird.f32 %v1741
        %vm1875 = vweird.f32 %v1869
        %vm1876 = vmor %vm1874, %vm1875
        %v1877 = vsel %vm1876, %v1869, %v1873
        %v1878 = vand.u32 2147483647, %v1741
        %vm1879 = vcmp.eq.f32.partialorder %v1878, 8.507059e+37
        %v1880 = vand.u32 %v1741, 2147483648
        %v1881 = vor.u32 1.1754944e-38, %v1880
        %v1882 = vsel %vm1879, %v1881, %v1877
        %v1883 = vmul.f32 1.0, %v1882
        %v1884 = vrcp.pop %v1742
        %v1885 = vmul.f32 %v1742, %v1884
        %v1886 = vsub.f32 1.0, %v1885
        %v1887 = vmul.f32 %v1884, %v1886
        %v1888 = vadd.f32 %v1884, %v1887
        %vm1889 = vweird.f32 %v1742
        %vm1890 = vweird.f32 %v1884
        %vm1891 = vmor %vm1889, %vm1890
        %v1892 = vsel %vm1891, %v1884, %v1888
        %v1893 = vand.u32 2147483647, %v1742
        %vm1894 = vcmp.eq.f32.partialorder %v1893, 8.507059e+37
        %v1895 = vand.u32 %v1742, 2147483648
        %v1896 = vor.u32 1.1754944e-38, %v1895
        %v1897 = vsel %vm1894, %v1896, %v1892
        %v1898 = vmul.f32 1.0, %v1897
        %v1899 = vrcp.pop %v1743
        %v1900 = vmul.f32 %v1743, %v1899
        %v1901 = vsub.f32 1.0, %v1900
        %v1902 = vmul.f32 %v1899, %v1901
        %v1903 = vadd.f32 %v1899, %v1902
        %vm1904 = vweird.f32 %v1743
        %vm1905 = vweird.f32 %v1899
        %vm1906 = vmor %vm1904, %vm1905
        %v1907 = vsel %vm1906, %v1899, %v1903
        %v1908 = vand.u32 2147483647, %v1743
        %vm1909 = vcmp.eq.f32.partialorder %v1908, 8.507059e+37
        %v1910 = vand.u32 %v1743, 2147483648
        %v1911 = vor.u32 1.1754944e-38, %v1910
        %v1912 = vsel %vm1909, %v1911, %v1907
        %v1913 = vmul.f32 1.0, %v1912
        %v1914 = vrcp.pop %v1744
        %v1915 = vmul.f32 %v1744, %v1914
        %v1916 = vsub.f32 1.0, %v1915
        %v1917 = vmul.f32 %v1914, %v1916
        %v1918 = vadd.f32 %v1914, %v1917
        %vm1919 = vweird.f32 %v1744
        %vm1920 = vweird.f32 %v1914
        %vm1921 = vmor %vm1919, %vm1920
        %v1922 = vsel %vm1921, %v1914, %v1918
        %v1923 = vand.u32 2147483647, %v1744
        %vm1924 = vcmp.eq.f32.partialorder %v1923, 8.507059e+37
        %v1925 = vand.u32 %v1744, 2147483648
        %v1926 = vor.u32 1.1754944e-38, %v1925
        %v1927 = vsel %vm1924, %v1926, %v1922
        %v1928 = vmul.f32 1.0, %v1927
        %v1929 = vrcp.pop %v1745
        %v1930 = vmul.f32 %v1745, %v1929
        %v1931 = vsub.f32 1.0, %v1930
        %v1932 = vmul.f32 %v1929, %v1931
        %v1933 = vadd.f32 %v1929, %v1932
        %vm1934 = vweird.f32 %v1745
        %vm1935 = vweird.f32 %v1929
        %vm1936 = vmor %vm1934, %vm1935
        %v1937 = vsel %vm1936, %v1929, %v1933
        %v1938 = vand.u32 2147483647, %v1745
        %vm1939 = vcmp.eq.f32.partialorder %v1938, 8.507059e+37
        %v1940 = vand.u32 %v1745, 2147483648
        %v1941 = vor.u32 1.1754944e-38, %v1940
        %v1942 = vsel %vm1939, %v1941, %v1937
        %v1943 = vmul.f32 1.0, %v1942
        %v1944 = vrcp.pop %v1746
        %v1945 = vmul.f32 %v1746, %v1944
        %v1946 = vsub.f32 1.0, %v1945
        %v1947 = vmul.f32 %v1944, %v1946
        %v1948 = vadd.f32 %v1944, %v1947
        %vm1949 = vweird.f32 %v1746
        %vm1950 = vweird.f32 %v1944
        %vm1951 = vmor %vm1949, %vm1950
        %v1952 = vsel %vm1951, %v1944, %v1948
        %v1953 = vand.u32 2147483647, %v1746
        %vm1954 = vcmp.eq.f32.partialorder %v1953, 8.507059e+37
        %v1955 = vand.u32 %v1746, 2147483648
        %v1956 = vor.u32 1.1754944e-38, %v1955
        %v1957 = vsel %vm1954, %v1956, %v1952
        %v1958 = vmul.f32 1.0, %v1957
        %v1959 = vrcp.pop %v1747
        %v1960 = vmul.f32 %v1747, %v1959
        %v1961 = vsub.f32 1.0, %v1960
        %v1962 = vmul.f32 %v1959, %v1961
        %v1963 = vadd.f32 %v1959, %v1962
        %vm1964 = vweird.f32 %v1747
        %vm1965 = vweird.f32 %v1959
        %vm1966 = vmor %vm1964, %vm1965
        %v1967 = vsel %vm1966, %v1959, %v1963
        %v1968 = vand.u32 2147483647, %v1747
        %vm1969 = vcmp.eq.f32.partialorder %v1968, 8.507059e+37
        %v1970 = vand.u32 %v1747, 2147483648
        %v1971 = vor.u32 1.1754944e-38, %v1970
        %v1972 = vsel %vm1969, %v1971, %v1967
        %v1973 = vmul.f32 1.0, %v1972
        %v1974 = vrcp.pop %v1748
        %v1975 = vmul.f32 %v1748, %v1974
        %v1976 = vsub.f32 1.0, %v1975
        %v1977 = vmul.f32 %v1974, %v1976
        %v1978 = vadd.f32 %v1974, %v1977
        %vm1979 = vweird.f32 %v1748
        %vm1980 = vweird.f32 %v1974
        %vm1981 = vmor %vm1979, %vm1980
        %v1982 = vsel %vm1981, %v1974, %v1978
        %v1983 = vand.u32 2147483647, %v1748
        %vm1984 = vcmp.eq.f32.partialorder %v1983, 8.507059e+37
        %v1985 = vand.u32 %v1748, 2147483648
        %v1986 = vor.u32 1.1754944e-38, %v1985
        %v1987 = vsel %vm1984, %v1986, %v1982
        %v1988 = vmul.f32 1.0, %v1987
        %v1989 = vxor.u32 %v1199, 2147483648
        %v1990 = vxor.u32 %v1346, 2147483648
        %v1991 = vxor.u32 %v1493, 2147483648
        %v1992 = vxor.u32 %v1640, 2147483648
        %v1993 = vxor.u32 %v1201, 2147483648
        %v1994 = vxor.u32 %v1348, 2147483648
        %v1995 = vxor.u32 %v1495, 2147483648
        %v1996 = vxor.u32 %v1642, 2147483648
        %v1997 = vxor.u32 %v1204, 2147483648
        %v1998 = vxor.u32 %v1351, 2147483648
        %v1999 = vxor.u32 %v1498, 2147483648
        %v2000 = vxor.u32 %v1645, 2147483648
        %v2001 = vxor.u32 %v1206, 2147483648
        %v2002 = vxor.u32 %v1353, 2147483648
        %v2003 = vxor.u32 %v1500, 2147483648
        %v2004 = vxor.u32 %v1647, 2147483648
        %v2005 = vmul.f32 %v1989, 1.442695
        %v2006 = vpow.pop %v2005
        %v2007 = vmul.f32 %v1990, 1.442695
        %v2008 = vpow.pop %v2007
        %v2009 = vmul.f32 %v1991, 1.442695
        %v2010 = vpow.pop %v2009
        %v2011 = vmul.f32 %v1992, 1.442695
        %v2012 = vpow.pop %v2011
        %v2013 = vmul.f32 %v1993, 1.442695
        %v2014 = vpow.pop %v2013
        %v2015 = vmul.f32 %v1994, 1.442695
        %v2016 = vpow.pop %v2015
        %v2017 = vmul.f32 %v1995, 1.442695
        %v2018 = vpow.pop %v2017
        %v2019 = vmul.f32 %v1996, 1.442695
        %v2020 = vpow.pop %v2019
        %v2021 = vmul.f32 %v1997, 1.442695
        %v2022 = vpow.pop %v2021
        %v2023 = vmul.f32 %v1998, 1.442695
        %v2024 = vpow.pop %v2023
        %v2025 = vmul.f32 %v1999, 1.442695
        %v2026 = vpow.pop %v2025
        %v2027 = vmul.f32 %v2000, 1.442695
        %v2028 = vpow.pop %v2027
        %v2029 = vmul.f32 %v2001, 1.442695
        %v2030 = vpow.pop %v2029
        %v2031 = vmul.f32 %v2002, 1.442695
        %v2032 = vpow.pop %v2031
        %v2033 = vmul.f32 %v2003, 1.442695
        %v2034 = vpow.pop %v2033
        %v2035 = vmul.f32 %v2004, 1.442695
        %v2036 = vpow.pop %v2035
        %v2037 = vadd.f32 %v2006, 1.0
        %v2038 = vadd.f32 %v2008, 1.0
        %v2039 = vadd.f32 %v2010, 1.0
        %v2040 = vadd.f32 %v2012, 1.0
        %v2041 = vadd.f32 %v2014, 1.0
        %v2042 = vadd.f32 %v2016, 1.0
        %v2043 = vadd.f32 %v2018, 1.0
        %v2044 = vadd.f32 %v2020, 1.0
        %v2045 = vadd.f32 %v2022, 1.0
        %v2046 = vadd.f32 %v2024, 1.0
        %v2047 = vadd.f32 %v2026, 1.0
        %v2048 = vadd.f32 %v2028, 1.0
        %v2049 = vadd.f32 %v2030, 1.0
        %v2050 = vadd.f32 %v2032, 1.0
        %v2051 = vadd.f32 %v2034, 1.0
        %v2052 = vadd.f32 %v2036, 1.0
        %v2053 = vrcp.pop %v2037
        %v2054 = vmul.f32 %v2037, %v2053
        %v2055 = vsub.f32 1.0, %v2054
        %v2056 = vmul.f32 %v2053, %v2055
        %v2057 = vadd.f32 %v2053, %v2056
        %vm2058 = vweird.f32 %v2037
        %vm2059 = vweird.f32 %v2053
        %vm2060 = vmor %vm2058, %vm2059
        %v2061 = vsel %vm2060, %v2053, %v2057
        %v2062 = vand.u32 2147483647, %v2037
        %vm2063 = vcmp.eq.f32.partialorder %v2062, 8.507059e+37
        %v2064 = vand.u32 %v2037, 2147483648
        %v2065 = vor.u32 1.1754944e-38, %v2064
        %v2066 = vsel %vm2063, %v2065, %v2061
        %v2067 = vmul.f32 1.0, %v2066
        %v2068 = vrcp.pop %v2038
        %v2069 = vmul.f32 %v2038, %v2068
        %v2070 = vsub.f32 1.0, %v2069
        %v2071 = vmul.f32 %v2068, %v2070
        %v2072 = vadd.f32 %v2068, %v2071
        %vm2073 = vweird.f32 %v2038
        %vm2074 = vweird.f32 %v2068
        %vm2075 = vmor %vm2073, %vm2074
        %v2076 = vsel %vm2075, %v2068, %v2072
        %v2077 = vand.u32 2147483647, %v2038
        %vm2078 = vcmp.eq.f32.partialorder %v2077, 8.507059e+37
        %v2079 = vand.u32 %v2038, 2147483648
        %v2080 = vor.u32 1.1754944e-38, %v2079
        %v2081 = vsel %vm2078, %v2080, %v2076
        %v2082 = vmul.f32 1.0, %v2081
        %v2083 = vrcp.pop %v2039
        %v2084 = vmul.f32 %v2039, %v2083
        %v2085 = vsub.f32 1.0, %v2084
        %v2086 = vmul.f32 %v2083, %v2085
        %v2087 = vadd.f32 %v2083, %v2086
        %vm2088 = vweird.f32 %v2039
        %vm2089 = vweird.f32 %v2083
        %vm2090 = vmor %vm2088, %vm2089
        %v2091 = vsel %vm2090, %v2083, %v2087
        %v2092 = vand.u32 2147483647, %v2039
        %vm2093 = vcmp.eq.f32.partialorder %v2092, 8.507059e+37
        %v2094 = vand.u32 %v2039, 2147483648
        %v2095 = vor.u32 1.1754944e-38, %v2094
        %v2096 = vsel %vm2093, %v2095, %v2091
        %v2097 = vmul.f32 1.0, %v2096
        %v2098 = vrcp.pop %v2040
        %v2099 = vmul.f32 %v2040, %v2098
        %v2100 = vsub.f32 1.0, %v2099
        %v2101 = vmul.f32 %v2098, %v2100
        %v2102 = vadd.f32 %v2098, %v2101
        %vm2103 = vweird.f32 %v2040
        %vm2104 = vweird.f32 %v2098
        %vm2105 = vmor %vm2103, %vm2104
        %v2106 = vsel %vm2105, %v2098, %v2102
        %v2107 = vand.u32 2147483647, %v2040
        %vm2108 = vcmp.eq.f32.partialorder %v2107, 8.507059e+37
        %v2109 = vand.u32 %v2040, 2147483648
        %v2110 = vor.u32 1.1754944e-38, %v2109
        %v2111 = vsel %vm2108, %v2110, %v2106
        %v2112 = vmul.f32 1.0, %v2111
        %v2113 = vrcp.pop %v2041
        %v2114 = vmul.f32 %v2041, %v2113
        %v2115 = vsub.f32 1.0, %v2114
        %v2116 = vmul.f32 %v2113, %v2115
        %v2117 = vadd.f32 %v2113, %v2116
        %vm2118 = vweird.f32 %v2041
        %vm2119 = vweird.f32 %v2113
        %vm2120 = vmor %vm2118, %vm2119
        %v2121 = vsel %vm2120, %v2113, %v2117
        %v2122 = vand.u32 2147483647, %v2041
        %vm2123 = vcmp.eq.f32.partialorder %v2122, 8.507059e+37
        %v2124 = vand.u32 %v2041, 2147483648
        %v2125 = vor.u32 1.1754944e-38, %v2124
        %v2126 = vsel %vm2123, %v2125, %v2121
        %v2127 = vmul.f32 1.0, %v2126
        %v2128 = vrcp.pop %v2042
        %v2129 = vmul.f32 %v2042, %v2128
        %v2130 = vsub.f32 1.0, %v2129
        %v2131 = vmul.f32 %v2128, %v2130
        %v2132 = vadd.f32 %v2128, %v2131
        %vm2133 = vweird.f32 %v2042
        %vm2134 = vweird.f32 %v2128
        %vm2135 = vmor %vm2133, %vm2134
        %v2136 = vsel %vm2135, %v2128, %v2132
        %v2137 = vand.u32 2147483647, %v2042
        %vm2138 = vcmp.eq.f32.partialorder %v2137, 8.507059e+37
        %v2139 = vand.u32 %v2042, 2147483648
        %v2140 = vor.u32 1.1754944e-38, %v2139
        %v2141 = vsel %vm2138, %v2140, %v2136
        %v2142 = vmul.f32 1.0, %v2141
        %v2143 = vrcp.pop %v2043
        %v2144 = vmul.f32 %v2043, %v2143
        %v2145 = vsub.f32 1.0, %v2144
        %v2146 = vmul.f32 %v2143, %v2145
        %v2147 = vadd.f32 %v2143, %v2146
        %vm2148 = vweird.f32 %v2043
        %vm2149 = vweird.f32 %v2143
        %vm2150 = vmor %vm2148, %vm2149
        %v2151 = vsel %vm2150, %v2143, %v2147
        %v2152 = vand.u32 2147483647, %v2043
        %vm2153 = vcmp.eq.f32.partialorder %v2152, 8.507059e+37
        %v2154 = vand.u32 %v2043, 2147483648
        %v2155 = vor.u32 1.1754944e-38, %v2154
        %v2156 = vsel %vm2153, %v2155, %v2151
        %v2157 = vmul.f32 1.0, %v2156
        %v2158 = vrcp.pop %v2044
        %v2159 = vmul.f32 %v2044, %v2158
        %v2160 = vsub.f32 1.0, %v2159
        %v2161 = vmul.f32 %v2158, %v2160
        %v2162 = vadd.f32 %v2158, %v2161
        %vm2163 = vweird.f32 %v2044
        %vm2164 = vweird.f32 %v2158
        %vm2165 = vmor %vm2163, %vm2164
        %v2166 = vsel %vm2165, %v2158, %v2162
        %v2167 = vand.u32 2147483647, %v2044
        %vm2168 = vcmp.eq.f32.partialorder %v2167, 8.507059e+37
        %v2169 = vand.u32 %v2044, 2147483648
        %v2170 = vor.u32 1.1754944e-38, %v2169
        %v2171 = vsel %vm2168, %v2170, %v2166
        %v2172 = vmul.f32 1.0, %v2171
        %v2173 = vrcp.pop %v2045
        %v2174 = vmul.f32 %v2045, %v2173
        %v2175 = vsub.f32 1.0, %v2174
        %v2176 = vmul.f32 %v2173, %v2175
        %v2177 = vadd.f32 %v2173, %v2176
        %vm2178 = vweird.f32 %v2045
        %vm2179 = vweird.f32 %v2173
        %vm2180 = vmor %vm2178, %vm2179
        %v2181 = vsel %vm2180, %v2173, %v2177
        %v2182 = vand.u32 2147483647, %v2045
        %vm2183 = vcmp.eq.f32.partialorder %v2182, 8.507059e+37
        %v2184 = vand.u32 %v2045, 2147483648
        %v2185 = vor.u32 1.1754944e-38, %v2184
        %v2186 = vsel %vm2183, %v2185, %v2181
        %v2187 = vmul.f32 1.0, %v2186
        %v2188 = vrcp.pop %v2046
        %v2189 = vmul.f32 %v2046, %v2188
        %v2190 = vsub.f32 1.0, %v2189
        %v2191 = vmul.f32 %v2188, %v2190
        %v2192 = vadd.f32 %v2188, %v2191
        %vm2193 = vweird.f32 %v2046
        %vm2194 = vweird.f32 %v2188
        %vm2195 = vmor %vm2193, %vm2194
        %v2196 = vsel %vm2195, %v2188, %v2192
        %v2197 = vand.u32 2147483647, %v2046
        %vm2198 = vcmp.eq.f32.partialorder %v2197, 8.507059e+37
        %v2199 = vand.u32 %v2046, 2147483648
        %v2200 = vor.u32 1.1754944e-38, %v2199
        %v2201 = vsel %vm2198, %v2200, %v2196
        %v2202 = vmul.f32 1.0, %v2201
        %v2203 = vrcp.pop %v2047
        %v2204 = vmul.f32 %v2047, %v2203
        %v2205 = vsub.f32 1.0, %v2204
        %v2206 = vmul.f32 %v2203, %v2205
        %v2207 = vadd.f32 %v2203, %v2206
        %vm2208 = vweird.f32 %v2047
        %vm2209 = vweird.f32 %v2203
        %vm2210 = vmor %vm2208, %vm2209
        %v2211 = vsel %vm2210, %v2203, %v2207
        %v2212 = vand.u32 2147483647, %v2047
        %vm2213 = vcmp.eq.f32.partialorder %v2212, 8.507059e+37
        %v2214 = vand.u32 %v2047, 2147483648
        %v2215 = vor.u32 1.1754944e-38, %v2214
        %v2216 = vsel %vm2213, %v2215, %v2211
        %v2217 = vmul.f32 1.0, %v2216
        %v2218 = vrcp.pop %v2048
        %v2219 = vmul.f32 %v2048, %v2218
        %v2220 = vsub.f32 1.0, %v2219
        %v2221 = vmul.f32 %v2218, %v2220
        %v2222 = vadd.f32 %v2218, %v2221
        %vm2223 = vweird.f32 %v2048
        %vm2224 = vweird.f32 %v2218
        %vm2225 = vmor %vm2223, %vm2224
        %v2226 = vsel %vm2225, %v2218, %v2222
        %v2227 = vand.u32 2147483647, %v2048
        %vm2228 = vcmp.eq.f32.partialorder %v2227, 8.507059e+37
        %v2229 = vand.u32 %v2048, 2147483648
        %v2230 = vor.u32 1.1754944e-38, %v2229
        %v2231 = vsel %vm2228, %v2230, %v2226
        %v2232 = vmul.f32 1.0, %v2231
        %v2233 = vrcp.pop %v2049
        %v2234 = vmul.f32 %v2049, %v2233
        %v2235 = vsub.f32 1.0, %v2234
        %v2236 = vmul.f32 %v2233, %v2235
        %v2237 = vadd.f32 %v2233, %v2236
        %vm2238 = vweird.f32 %v2049
        %vm2239 = vweird.f32 %v2233
        %vm2240 = vmor %vm2238, %vm2239
        %v2241 = vsel %vm2240, %v2233, %v2237
        %v2242 = vand.u32 2147483647, %v2049
        %vm2243 = vcmp.eq.f32.partialorder %v2242, 8.507059e+37
        %v2244 = vand.u32 %v2049, 2147483648
        %v2245 = vor.u32 1.1754944e-38, %v2244
        %v2246 = vsel %vm2243, %v2245, %v2241
        %v2247 = vmul.f32 1.0, %v2246
        %v2248 = vrcp.pop %v2050
        %v2249 = vmul.f32 %v2050, %v2248
        %v2250 = vsub.f32 1.0, %v2249
        %v2251 = vmul.f32 %v2248, %v2250
        %v2252 = vadd.f32 %v2248, %v2251
        %vm2253 = vweird.f32 %v2050
        %vm2254 = vweird.f32 %v2248
        %vm2255 = vmor %vm2253, %vm2254
        %v2256 = vsel %vm2255, %v2248, %v2252
        %v2257 = vand.u32 2147483647, %v2050
        %vm2258 = vcmp.eq.f32.partialorder %v2257, 8.507059e+37
        %v2259 = vand.u32 %v2050, 2147483648
        %v2260 = vor.u32 1.1754944e-38, %v2259
        %v2261 = vsel %vm2258, %v2260, %v2256
        %v2262 = vmul.f32 1.0, %v2261
        %v2263 = vrcp.pop %v2051
        %v2264 = vmul.f32 %v2051, %v2263
        %v2265 = vsub.f32 1.0, %v2264
        %v2266 = vmul.f32 %v2263, %v2265
        %v2267 = vadd.f32 %v2263, %v2266
        %vm2268 = vweird.f32 %v2051
        %vm2269 = vweird.f32 %v2263
        %vm2270 = vmor %vm2268, %vm2269
        %v2271 = vsel %vm2270, %v2263, %v2267
        %v2272 = vand.u32 2147483647, %v2051
        %vm2273 = vcmp.eq.f32.partialorder %v2272, 8.507059e+37
        %v2274 = vand.u32 %v2051, 2147483648
        %v2275 = vor.u32 1.1754944e-38, %v2274
        %v2276 = vsel %vm2273, %v2275, %v2271
        %v2277 = vmul.f32 1.0, %v2276
        %v2278 = vrcp.pop %v2052
        %v2279 = vmul.f32 %v2052, %v2278
        %v2280 = vsub.f32 1.0, %v2279
        %v2281 = vmul.f32 %v2278, %v2280
        %v2282 = vadd.f32 %v2278, %v2281
        %vm2283 = vweird.f32 %v2052
        %vm2284 = vweird.f32 %v2278
        %vm2285 = vmor %vm2283, %vm2284
        %v2286 = vsel %vm2285, %v2278, %v2282
        %v2287 = vand.u32 2147483647, %v2052
        %vm2288 = vcmp.eq.f32.partialorder %v2287, 8.507059e+37
        %v2289 = vand.u32 %v2052, 2147483648
        %v2290 = vor.u32 1.1754944e-38, %v2289
        %v2291 = vsel %vm2288, %v2290, %v2286
        %v2292 = vmul.f32 1.0, %v2291
        %v2293 = vtanh.pop %v1219
        %v2294 = vtanh.pop %v1366
        %v2295 = vtanh.pop %v1513
        %v2296 = vtanh.pop %v1660
        %v2297 = vtanh.pop %v1221
        %v2298 = vtanh.pop %v1368
        %v2299 = vtanh.pop %v1515
        %v2300 = vtanh.pop %v1662
        %v2301 = vtanh.pop %v1224
        %v2302 = vtanh.pop %v1371
        %v2303 = vtanh.pop %v1518
        %v2304 = vtanh.pop %v1665
        %v2305 = vtanh.pop %v1226
        %v2306 = vtanh.pop %v1373
        %v2307 = vtanh.pop %v1520
        %v2308 = vtanh.pop %v1667
        %v2309 = vmul.f32 %v2067, %v1669
        %v2310 = vmul.f32 %v2082, %v1670
        %v2311 = vmul.f32 %v2097, %v1671
        %v2312 = vmul.f32 %v2112, %v1672
        %v2313 = vmul.f32 %v2127, %v1673
        %v2314 = vmul.f32 %v2142, %v1674
        %v2315 = vmul.f32 %v2157, %v1675
        %v2316 = vmul.f32 %v2172, %v1676
        %v2317 = vmul.f32 %v2187, %v1677
        %v2318 = vmul.f32 %v2202, %v1678
        %v2319 = vmul.f32 %v2217, %v1679
        %v2320 = vmul.f32 %v2232, %v1680
        %v2321 = vmul.f32 %v2247, %v1681
        %v2322 = vmul.f32 %v2262, %v1682
        %v2323 = vmul.f32 %v2277, %v1683
        %v2324 = vmul.f32 %v2292, %v1684
        %v2325 = vmul.f32 %v1763, %v2293
        %v2326 = vmul.f32 %v1778, %v2294
        %v2327 = vmul.f32 %v1793, %v2295
        %v2328 = vmul.f32 %v1808, %v2296
        %v2329 = vmul.f32 %v1823, %v2297
        %v2330 = vmul.f32 %v1838, %v2298
        %v2331 = vmul.f32 %v1853, %v2299
        %v2332 = vmul.f32 %v1868, %v2300
        %v2333 = vmul.f32 %v1883, %v2301
        %v2334 = vmul.f32 %v1898, %v2302
        %v2335 = vmul.f32 %v1913, %v2303
        %v2336 = vmul.f32 %v1928, %v2304
        %v2337 = vmul.f32 %v1943, %v2305
        %v2338 = vmul.f32 %v1958, %v2306
        %v2339 = vmul.f32 %v1973, %v2307
        %v2340 = vmul.f32 %v1988, %v2308
        %v2341 = vadd.f32 %v2309, %v2325
        %v2342 = vadd.f32 %v2310, %v2326
        %v2343 = vadd.f32 %v2311, %v2327
        %v2344 = vadd.f32 %v2312, %v2328
        %v2345 = vadd.f32 %v2313, %v2329
        %v2346 = vadd.f32 %v2314, %v2330
        %v2347 = vadd.f32 %v2315, %v2331
        %v2348 = vadd.f32 %v2316, %v2332
        %v2349 = vadd.f32 %v2317, %v2333
        %v2350 = vadd.f32 %v2318, %v2334
        %v2351 = vadd.f32 %v2319, %v2335
        %v2352 = vadd.f32 %v2320, %v2336
        %v2353 = vadd.f32 %v2321, %v2337
        %v2354 = vadd.f32 %v2322, %v2338
        %v2355 = vadd.f32 %v2323, %v2339
        %v2356 = vadd.f32 %v2324, %v2340
        %v2357 = vxor.u32 %v1209, 2147483648
        %v2358 = vxor.u32 %v1356, 2147483648
        %v2359 = vxor.u32 %v1503, 2147483648
        %v2360 = vxor.u32 %v1650, 2147483648
        %v2361 = vxor.u32 %v1211, 2147483648
        %v2362 = vxor.u32 %v1358, 2147483648
        %v2363 = vxor.u32 %v1505, 2147483648
        %v2364 = vxor.u32 %v1652, 2147483648
        %v2365 = vxor.u32 %v1214, 2147483648
        %v2366 = vxor.u32 %v1361, 2147483648
        %v2367 = vxor.u32 %v1508, 2147483648
        %v2368 = vxor.u32 %v1655, 2147483648
        %v2369 = vxor.u32 %v1216, 2147483648
        %v2370 = vxor.u32 %v1363, 2147483648
        %v2371 = vxor.u32 %v1510, 2147483648
        %v2372 = vxor.u32 %v1657, 2147483648
        %v2373 = vmul.f32 %v2357, 1.442695
        %v2374 = vpow.pop %v2373
        %v2375 = vmul.f32 %v2358, 1.442695
        %v2376 = vpow.pop %v2375
        %v2377 = vmul.f32 %v2359, 1.442695
        %v2378 = vpow.pop %v2377
        %v2379 = vmul.f32 %v2360, 1.442695
        %v2380 = vpow.pop %v2379
        %v2381 = vmul.f32 %v2361, 1.442695
        %v2382 = vpow.pop %v2381
        %v2383 = vmul.f32 %v2362, 1.442695
        %v2384 = vpow.pop %v2383
        %v2385 = vmul.f32 %v2363, 1.442695
        %v2386 = vpow.pop %v2385
        %v2387 = vmul.f32 %v2364, 1.442695
        %v2388 = vpow.pop %v2387
        %v2389 = vmul.f32 %v2365, 1.442695
        %v2390 = vpow.pop %v2389
        %v2391 = vmul.f32 %v2366, 1.442695
        %v2392 = vpow.pop %v2391
        %v2393 = vmul.f32 %v2367, 1.442695
        %v2394 = vpow.pop %v2393
        %v2395 = vmul.f32 %v2368, 1.442695
        %v2396 = vpow.pop %v2395
        %v2397 = vmul.f32 %v2369, 1.442695
        %v2398 = vpow.pop %v2397
        %v2399 = vmul.f32 %v2370, 1.442695
        %v2400 = vpow.pop %v2399
        %v2401 = vmul.f32 %v2371, 1.442695
        %v2402 = vpow.pop %v2401
        %v2403 = vmul.f32 %v2372, 1.442695
        %v2404 = vpow.pop %v2403
        %v2405 = vadd.f32 %v2374, 1.0
        %v2406 = vadd.f32 %v2376, 1.0
        %v2407 = vadd.f32 %v2378, 1.0
        %v2408 = vadd.f32 %v2380, 1.0
        %v2409 = vadd.f32 %v2382, 1.0
        %v2410 = vadd.f32 %v2384, 1.0
        %v2411 = vadd.f32 %v2386, 1.0
        %v2412 = vadd.f32 %v2388, 1.0
        %v2413 = vadd.f32 %v2390, 1.0
        %v2414 = vadd.f32 %v2392, 1.0
        %v2415 = vadd.f32 %v2394, 1.0
        %v2416 = vadd.f32 %v2396, 1.0
        %v2417 = vadd.f32 %v2398, 1.0
        %v2418 = vadd.f32 %v2400, 1.0
        %v2419 = vadd.f32 %v2402, 1.0
        %v2420 = vadd.f32 %v2404, 1.0
        %v2421 = vrcp.pop %v2405
        %v2422 = vmul.f32 %v2405, %v2421
        %v2423 = vsub.f32 1.0, %v2422
        %v2424 = vmul.f32 %v2421, %v2423
        %v2425 = vadd.f32 %v2421, %v2424
        %vm2426 = vweird.f32 %v2405
        %vm2427 = vweird.f32 %v2421
        %vm2428 = vmor %vm2426, %vm2427
        %v2429 = vsel %vm2428, %v2421, %v2425
        %v2430 = vand.u32 2147483647, %v2405
        %vm2431 = vcmp.eq.f32.partialorder %v2430, 8.507059e+37
        %v2432 = vand.u32 %v2405, 2147483648
        %v2433 = vor.u32 1.1754944e-38, %v2432
        %v2434 = vsel %vm2431, %v2433, %v2429
        %v2435 = vmul.f32 1.0, %v2434
        %v2436 = vrcp.pop %v2406
        %v2437 = vmul.f32 %v2406, %v2436
        %v2438 = vsub.f32 1.0, %v2437
        %v2439 = vmul.f32 %v2436, %v2438
        %v2440 = vadd.f32 %v2436, %v2439
        %vm2441 = vweird.f32 %v2406
        %vm2442 = vweird.f32 %v2436
        %vm2443 = vmor %vm2441, %vm2442
        %v2444 = vsel %vm2443, %v2436, %v2440
        %v2445 = vand.u32 2147483647, %v2406
        %vm2446 = vcmp.eq.f32.partialorder %v2445, 8.507059e+37
        %v2447 = vand.u32 %v2406, 2147483648
        %v2448 = vor.u32 1.1754944e-38, %v2447
        %v2449 = vsel %vm2446, %v2448, %v2444
        %v2450 = vmul.f32 1.0, %v2449
        %v2451 = vrcp.pop %v2407
        %v2452 = vmul.f32 %v2407, %v2451
        %v2453 = vsub.f32 1.0, %v2452
        %v2454 = vmul.f32 %v2451, %v2453
        %v2455 = vadd.f32 %v2451, %v2454
        %vm2456 = vweird.f32 %v2407
        %vm2457 = vweird.f32 %v2451
        %vm2458 = vmor %vm2456, %vm2457
        %v2459 = vsel %vm2458, %v2451, %v2455
        %v2460 = vand.u32 2147483647, %v2407
        %vm2461 = vcmp.eq.f32.partialorder %v2460, 8.507059e+37
        %v2462 = vand.u32 %v2407, 2147483648
        %v2463 = vor.u32 1.1754944e-38, %v2462
        %v2464 = vsel %vm2461, %v2463, %v2459
        %v2465 = vmul.f32 1.0, %v2464
        %v2466 = vrcp.pop %v2408
        %v2467 = vmul.f32 %v2408, %v2466
        %v2468 = vsub.f32 1.0, %v2467
        %v2469 = vmul.f32 %v2466, %v2468
        %v2470 = vadd.f32 %v2466, %v2469
        %vm2471 = vweird.f32 %v2408
        %vm2472 = vweird.f32 %v2466
        %vm2473 = vmor %vm2471, %vm2472
        %v2474 = vsel %vm2473, %v2466, %v2470
        %v2475 = vand.u32 2147483647, %v2408
        %vm2476 = vcmp.eq.f32.partialorder %v2475, 8.507059e+37
        %v2477 = vand.u32 %v2408, 2147483648
        %v2478 = vor.u32 1.1754944e-38, %v2477
        %v2479 = vsel %vm2476, %v2478, %v2474
        %v2480 = vmul.f32 1.0, %v2479
        %v2481 = vrcp.pop %v2409
        %v2482 = vmul.f32 %v2409, %v2481
        %v2483 = vsub.f32 1.0, %v2482
        %v2484 = vmul.f32 %v2481, %v2483
        %v2485 = vadd.f32 %v2481, %v2484
        %vm2486 = vweird.f32 %v2409
        %vm2487 = vweird.f32 %v2481
        %vm2488 = vmor %vm2486, %vm2487
        %v2489 = vsel %vm2488, %v2481, %v2485
        %v2490 = vand.u32 2147483647, %v2409
        %vm2491 = vcmp.eq.f32.partialorder %v2490, 8.507059e+37
        %v2492 = vand.u32 %v2409, 2147483648
        %v2493 = vor.u32 1.1754944e-38, %v2492
        %v2494 = vsel %vm2491, %v2493, %v2489
        %v2495 = vmul.f32 1.0, %v2494
        %v2496 = vrcp.pop %v2410
        %v2497 = vmul.f32 %v2410, %v2496
        %v2498 = vsub.f32 1.0, %v2497
        %v2499 = vmul.f32 %v2496, %v2498
        %v2500 = vadd.f32 %v2496, %v2499
        %vm2501 = vweird.f32 %v2410
        %vm2502 = vweird.f32 %v2496
        %vm2503 = vmor %vm2501, %vm2502
        %v2504 = vsel %vm2503, %v2496, %v2500
        %v2505 = vand.u32 2147483647, %v2410
        %vm2506 = vcmp.eq.f32.partialorder %v2505, 8.507059e+37
        %v2507 = vand.u32 %v2410, 2147483648
        %v2508 = vor.u32 1.1754944e-38, %v2507
        %v2509 = vsel %vm2506, %v2508, %v2504
        %v2510 = vmul.f32 1.0, %v2509
        %v2511 = vrcp.pop %v2411
        %v2512 = vmul.f32 %v2411, %v2511
        %v2513 = vsub.f32 1.0, %v2512
        %v2514 = vmul.f32 %v2511, %v2513
        %v2515 = vadd.f32 %v2511, %v2514
        %vm2516 = vweird.f32 %v2411
        %vm2517 = vweird.f32 %v2511
        %vm2518 = vmor %vm2516, %vm2517
        %v2519 = vsel %vm2518, %v2511, %v2515
        %v2520 = vand.u32 2147483647, %v2411
        %vm2521 = vcmp.eq.f32.partialorder %v2520, 8.507059e+37
        %v2522 = vand.u32 %v2411, 2147483648
        %v2523 = vor.u32 1.1754944e-38, %v2522
        %v2524 = vsel %vm2521, %v2523, %v2519
        %v2525 = vmul.f32 1.0, %v2524
        %v2526 = vrcp.pop %v2412
        %v2527 = vmul.f32 %v2412, %v2526
        %v2528 = vsub.f32 1.0, %v2527
        %v2529 = vmul.f32 %v2526, %v2528
        %v2530 = vadd.f32 %v2526, %v2529
        %vm2531 = vweird.f32 %v2412
        %vm2532 = vweird.f32 %v2526
        %vm2533 = vmor %vm2531, %vm2532
        %v2534 = vsel %vm2533, %v2526, %v2530
        %v2535 = vand.u32 2147483647, %v2412
        %vm2536 = vcmp.eq.f32.partialorder %v2535, 8.507059e+37
        %v2537 = vand.u32 %v2412, 2147483648
        %v2538 = vor.u32 1.1754944e-38, %v2537
        %v2539 = vsel %vm2536, %v2538, %v2534
        %v2540 = vmul.f32 1.0, %v2539
        %v2541 = vrcp.pop %v2413
        %v2542 = vmul.f32 %v2413, %v2541
        %v2543 = vsub.f32 1.0, %v2542
        %v2544 = vmul.f32 %v2541, %v2543
        %v2545 = vadd.f32 %v2541, %v2544
        %vm2546 = vweird.f32 %v2413
        %vm2547 = vweird.f32 %v2541
        %vm2548 = vmor %vm2546, %vm2547
        %v2549 = vsel %vm2548, %v2541, %v2545
        %v2550 = vand.u32 2147483647, %v2413
        %vm2551 = vcmp.eq.f32.partialorder %v2550, 8.507059e+37
        %v2552 = vand.u32 %v2413, 2147483648
        %v2553 = vor.u32 1.1754944e-38, %v2552
        %v2554 = vsel %vm2551, %v2553, %v2549
        %v2555 = vmul.f32 1.0, %v2554
        %v2556 = vrcp.pop %v2414
        %v2557 = vmul.f32 %v2414, %v2556
        %v2558 = vsub.f32 1.0, %v2557
        %v2559 = vmul.f32 %v2556, %v2558
        %v2560 = vadd.f32 %v2556, %v2559
        %vm2561 = vweird.f32 %v2414
        %vm2562 = vweird.f32 %v2556
        %vm2563 = vmor %vm2561, %vm2562
        %v2564 = vsel %vm2563, %v2556, %v2560
        %v2565 = vand.u32 2147483647, %v2414
        %vm2566 = vcmp.eq.f32.partialorder %v2565, 8.507059e+37
        %v2567 = vand.u32 %v2414, 2147483648
        %v2568 = vor.u32 1.1754944e-38, %v2567
        %v2569 = vsel %vm2566, %v2568, %v2564
        %v2570 = vmul.f32 1.0, %v2569
        %v2571 = vrcp.pop %v2415
        %v2572 = vmul.f32 %v2415, %v2571
        %v2573 = vsub.f32 1.0, %v2572
        %v2574 = vmul.f32 %v2571, %v2573
        %v2575 = vadd.f32 %v2571, %v2574
        %vm2576 = vweird.f32 %v2415
        %vm2577 = vweird.f32 %v2571
        %vm2578 = vmor %vm2576, %vm2577
        %v2579 = vsel %vm2578, %v2571, %v2575
        %v2580 = vand.u32 2147483647, %v2415
        %vm2581 = vcmp.eq.f32.partialorder %v2580, 8.507059e+37
        %v2582 = vand.u32 %v2415, 2147483648
        %v2583 = vor.u32 1.1754944e-38, %v2582
        %v2584 = vsel %vm2581, %v2583, %v2579
        %v2585 = vmul.f32 1.0, %v2584
        %v2586 = vrcp.pop %v2416
        %v2587 = vmul.f32 %v2416, %v2586
        %v2588 = vsub.f32 1.0, %v2587
        %v2589 = vmul.f32 %v2586, %v2588
        %v2590 = vadd.f32 %v2586, %v2589
        %vm2591 = vweird.f32 %v2416
        %vm2592 = vweird.f32 %v2586
        %vm2593 = vmor %vm2591, %vm2592
        %v2594 = vsel %vm2593, %v2586, %v2590
        %v2595 = vand.u32 2147483647, %v2416
        %vm2596 = vcmp.eq.f32.partialorder %v2595, 8.507059e+37
        %v2597 = vand.u32 %v2416, 2147483648
        %v2598 = vor.u32 1.1754944e-38, %v2597
        %v2599 = vsel %vm2596, %v2598, %v2594
        %v2600 = vmul.f32 1.0, %v2599
        %v2601 = vrcp.pop %v2417
        %v2602 = vmul.f32 %v2417, %v2601
        %v2603 = vsub.f32 1.0, %v2602
        %v2604 = vmul.f32 %v2601, %v2603
        %v2605 = vadd.f32 %v2601, %v2604
        %vm2606 = vweird.f32 %v2417
        %vm2607 = vweird.f32 %v2601
        %vm2608 = vmor %vm2606, %vm2607
        %v2609 = vsel %vm2608, %v2601, %v2605
        %v2610 = vand.u32 2147483647, %v2417
        %vm2611 = vcmp.eq.f32.partialorder %v2610, 8.507059e+37
        %v2612 = vand.u32 %v2417, 2147483648
        %v2613 = vor.u32 1.1754944e-38, %v2612
        %v2614 = vsel %vm2611, %v2613, %v2609
        %v2615 = vmul.f32 1.0, %v2614
        %v2616 = vrcp.pop %v2418
        %v2617 = vmul.f32 %v2418, %v2616
        %v2618 = vsub.f32 1.0, %v2617
        %v2619 = vmul.f32 %v2616, %v2618
        %v2620 = vadd.f32 %v2616, %v2619
        %vm2621 = vweird.f32 %v2418
        %vm2622 = vweird.f32 %v2616
        %vm2623 = vmor %vm2621, %vm2622
        %v2624 = vsel %vm2623, %v2616, %v2620
        %v2625 = vand.u32 2147483647, %v2418
        %vm2626 = vcmp.eq.f32.partialorder %v2625, 8.507059e+37
        %v2627 = vand.u32 %v2418, 2147483648
        %v2628 = vor.u32 1.1754944e-38, %v2627
        %v2629 = vsel %vm2626, %v2628, %v2624
        %v2630 = vmul.f32 1.0, %v2629
        %v2631 = vrcp.pop %v2419
        %v2632 = vmul.f32 %v2419, %v2631
        %v2633 = vsub.f32 1.0, %v2632
        %v2634 = vmul.f32 %v2631, %v2633
        %v2635 = vadd.f32 %v2631, %v2634
        %vm2636 = vweird.f32 %v2419
        %vm2637 = vweird.f32 %v2631
        %vm2638 = vmor %vm2636, %vm2637
        %v2639 = vsel %vm2638, %v2631, %v2635
        %v2640 = vand.u32 2147483647, %v2419
        %vm2641 = vcmp.eq.f32.partialorder %v2640, 8.507059e+37
        %v2642 = vand.u32 %v2419, 2147483648
        %v2643 = vor.u32 1.1754944e-38, %v2642
        %v2644 = vsel %vm2641, %v2643, %v2639
        %v2645 = vmul.f32 1.0, %v2644
        %v2646 = vrcp.pop %v2420
        %v2647 = vmul.f32 %v2420, %v2646
        %v2648 = vsub.f32 1.0, %v2647
        %v2649 = vmul.f32 %v2646, %v2648
        %v2650 = vadd.f32 %v2646, %v2649
        %vm2651 = vweird.f32 %v2420
        %vm2652 = vweird.f32 %v2646
        %vm2653 = vmor %vm2651, %vm2652
        %v2654 = vsel %vm2653, %v2646, %v2650
        %v2655 = vand.u32 2147483647, %v2420
        %vm2656 = vcmp.eq.f32.partialorder %v2655, 8.507059e+37
        %v2657 = vand.u32 %v2420, 2147483648
        %v2658 = vor.u32 1.1754944e-38, %v2657
        %v2659 = vsel %vm2656, %v2658, %v2654
        %v2660 = vmul.f32 1.0, %v2659
        %v2661 = vtanh.pop %v2341
        %v2662 = vtanh.pop %v2342
        %v2663 = vtanh.pop %v2343
        %v2664 = vtanh.pop %v2344
        %v2665 = vtanh.pop %v2345
        %v2666 = vtanh.pop %v2346
        %v2667 = vtanh.pop %v2347
        %v2668 = vtanh.pop %v2348
        %v2669 = vtanh.pop %v2349
        %v2670 = vtanh.pop %v2350
        %v2671 = vtanh.pop %v2351
        %v2672 = vtanh.pop %v2352
        %v2673 = vtanh.pop %v2353
        %v2674 = vtanh.pop %v2354
        %v2675 = vtanh.pop %v2355
        %v2676 = vtanh.pop %v2356
        %v2677 = vmul.f32 %v2435, %v2661
        %v2678 = vmul.f32 %v2450, %v2662
        %v2679 = vmul.f32 %v2465, %v2663
        %v2680 = vmul.f32 %v2480, %v2664
        %v2681 = vmul.f32 %v2495, %v2665
        %v2682 = vmul.f32 %v2510, %v2666
        %v2683 = vmul.f32 %v2525, %v2667
        %v2684 = vmul.f32 %v2540, %v2668
        %v2685 = vmul.f32 %v2555, %v2669
        %v2686 = vmul.f32 %v2570, %v2670
        %v2687 = vmul.f32 %v2585, %v2671
        %v2688 = vmul.f32 %v2600, %v2672
        %v2689 = vmul.f32 %v2615, %v2673
        %v2690 = vmul.f32 %v2630, %v2674
        %v2691 = vmul.f32 %v2645, %v2675
        %v2692 = vmul.f32 %v2660, %v2676
        %2693 = vst [vmem:[%s290] sm:$0xff] %v2677
        %2694 = vst [vmem:[%s290 + $0x8] sm:$0xff] %v2678
        %2695 = vst [vmem:[%s290 + $0x10] sm:$0xff] %v2679
        %2696 = vst [vmem:[%s290 + $0x18] sm:$0xff] %v2680
        %2697 = vst [vmem:[%s290 + $0x20] sm:$0xff] %v2681
        %2698 = vst [vmem:[%s290 + $0x28] sm:$0xff] %v2682
        %2699 = vst [vmem:[%s290 + $0x30] sm:$0xff] %v2683
        %2700 = vst [vmem:[%s290 + $0x38] sm:$0xff] %v2684
        %2701 = vst [vmem:[%s290 + $0x40] sm:$0xff] %v2685
        %2702 = vst [vmem:[%s290 + $0x48] sm:$0xff] %v2686
        %2703 = vst [vmem:[%s290 + $0x50] sm:$0xff] %v2687
        %2704 = vst [vmem:[%s290 + $0x58] sm:$0xff] %v2688
        %2705 = vst [vmem:[%s290 + $0x60] sm:$0xff] %v2689
        %2706 = vst [vmem:[%s290 + $0x68] sm:$0xff] %v2690
        %2707 = vst [vmem:[%s290 + $0x70] sm:$0xff] %v2691
        %2708 = vst [vmem:[%s290 + $0x78] sm:$0xff] %v2692
        %2709 = vst [vmem:[%s297] sm:$0xff] %v2341
        %2710 = vst [vmem:[%s297 + $0x8] sm:$0xff] %v2342
        %2711 = vst [vmem:[%s297 + $0x10] sm:$0xff] %v2343
        %2712 = vst [vmem:[%s297 + $0x18] sm:$0xff] %v2344
        %2713 = vst [vmem:[%s297 + $0x20] sm:$0xff] %v2345
        %2714 = vst [vmem:[%s297 + $0x28] sm:$0xff] %v2346
        %2715 = vst [vmem:[%s297 + $0x30] sm:$0xff] %v2347
        %2716 = vst [vmem:[%s297 + $0x38] sm:$0xff] %v2348
        %2717 = vst [vmem:[%s297 + $0x40] sm:$0xff] %v2349
        %2718 = vst [vmem:[%s297 + $0x48] sm:$0xff] %v2350
        %2719 = vst [vmem:[%s297 + $0x50] sm:$0xff] %v2351
        %2720 = vst [vmem:[%s297 + $0x58] sm:$0xff] %v2352
        %2721 = vst [vmem:[%s297 + $0x60] sm:$0xff] %v2353
        %2722 = vst [vmem:[%s297 + $0x68] sm:$0xff] %v2354
        %2723 = vst [vmem:[%s297 + $0x70] sm:$0xff] %v2355
        %2724 = vst [vmem:[%s297 + $0x78] sm:$0xff] %v2356
        %s2725 = sand.u32 %s131, 1
        %s2726 = scalar_lea.sflag [#allocation4], %s2725
        %s2727 = sand.u32 %s131, 1
        %s2728 = smul.addr %s2727, 128
        %s2729 = scalar_lea.vmem [#allocation7], %s2728
        %s2730 = sand.u32 %s157, 1
        %s2731 = scalar_lea.sflag [#allocation9], %s2730
        %s2732 = sand.u32 %s157, 1
        %s2733 = smul.addr %s2732, 128
        %s2734 = scalar_lea.vmem [#allocation8], %s2733
        // Predicated region
        $region45: #{tpu_custom_call.1} parent=35 // pred_check
          %p2735 = pneg %p141
        $region46: #{tpu_custom_call.1} parent=35 // pred_check_branch
          %2737 = sbr.rel (%p2735) target = $region48
        $region47: #{tpu_custom_call.1} parent=35 // pred_region
          %s2738 = smul.u32 4, %s29
          %2740 = vsyncadd %s2726, 0
          %s2741 = smul.addr %s2738, 8
          %s2742 = scalar_lea.hbm %s4, %s2741
          %s2743 = sshll.u32 %s2729, 4
          %s2744 = int_to_ptr.vmem [resolvable:$true] %s2743
          %s2745 = sshll.u32 %s2742, 4
          %s2746 = int_to_ptr.hbm [resolvable:$true] %s2745
          %2751 = dma.vmem_to_hbm [thread:$0]  %s2744, 2048, %s2746, %s2726, 512, 2048, 32
        $region48: #{tpu_custom_call.1} parent=35 // pred_fallthru
          _
        // Predicated region
        $region49: #{tpu_custom_call.1} parent=35 // pred_check
          %p2752 = pneg %p167
        $region50: #{tpu_custom_call.1} parent=35 // pred_check_branch
          %2754 = sbr.rel (%p2752) target = $region52
        $region51: #{tpu_custom_call.1} parent=35 // pred_region
          %s2755 = smul.u32 4, %s29
          %2757 = vsyncadd %s2731, 0
          %s2758 = smul.addr %s2755, 8
          %s2759 = scalar_lea.hbm %s5, %s2758
          %s2760 = sshll.u32 %s2734, 4
          %s2761 = int_to_ptr.vmem [resolvable:$true] %s2760
          %s2762 = sshll.u32 %s2759, 4
          %s2763 = int_to_ptr.hbm [resolvable:$true] %s2762
          %2768 = dma.vmem_to_hbm [thread:$0]  %s2761, 2048, %s2763, %s2731, 512, 2048, 32
        $region52: #{tpu_custom_call.1} parent=35 // pred_fallthru
          _
      $region36: #{tpu_custom_call.1} parent=5 // pred_fallthru
        _
      %p2769 = scmp.le.s32.totalorder 2, %s24
      // Predicated region
      $region53: #{tpu_custom_call.1} parent=5 // pred_check
        %p2770 = pneg %p2769
      $region54: #{tpu_custom_call.1} parent=5 // pred_check_branch
        %2772 = sbr.rel (%p2770) target = $region56
      $region55: #{tpu_custom_call.1} parent=5 // pred_region
        %s2773 = ssub.s32 %s24, 2
        // Predicated region
        $region57: #{tpu_custom_call.1} parent=55 // pred_check
          %p2774 = pneg %p147
        $region58: #{tpu_custom_call.1} parent=55 // pred_check_branch
          %2776 = sbr.rel (%p2774) target = $region60
        $region59: #{tpu_custom_call.1} parent=55 // pred_region
          %s2777 = sand.u32 %s132, 1
          %s2778 = scalar_lea.sflag [#allocation4], %s2777
          %s2779 = sand.u32 %s132, 1
          %s2780 = smul.addr %s2779, 128
          %s2781 = scalar_lea.vmem [#allocation7], %s2780
          %2783 = dma.done %s2778, 2048
        $region60: #{tpu_custom_call.1} parent=55 // pred_fallthru
          _
        // Predicated region
        $region61: #{tpu_custom_call.1} parent=55 // pred_check
          %p2784 = pneg %p173
        $region62: #{tpu_custom_call.1} parent=55 // pred_check_branch
          %2786 = sbr.rel (%p2784) target = $region64
        $region63: #{tpu_custom_call.1} parent=55 // pred_region
          %s2787 = sand.u32 %s158, 1
          %s2788 = scalar_lea.sflag [#allocation9], %s2787
          %s2789 = sand.u32 %s158, 1
          %s2790 = smul.addr %s2789, 128
          %s2791 = scalar_lea.vmem [#allocation8], %s2790
          %2793 = dma.done %s2788, 2048
        $region64: #{tpu_custom_call.1} parent=55 // pred_fallthru
          _
      $region56: #{tpu_custom_call.1} parent=5 // pred_fallthru
        _
    $region6: #{tpu_custom_call.1} parent=1 // loop_footer
      %s28 = sadd.s32 1, %s24
    $region7: #{tpu_custom_call.1} parent=1 // loop_footer_branch
      %23 = sbr.rel target = $region3
    $region8: #{tpu_custom_call.1} parent=1 // loop_exit
      _
    %2794 = vsyncpa [#allocation3], 1
    %s2795 = scalar_lea.sflag [#allocation3], 1
    %2796 = vsyncpa %s2795, 1
    %2797 = vsyncpa [#allocation6], 1
    %s2798 = scalar_lea.sflag [#allocation6], 1
    %2799 = vsyncpa %s2798, 1
    %2800 = vsyncpa [#allocation4], 1
    %s2801 = scalar_lea.sflag [#allocation4], 1
    %2802 = vsyncpa %s2801, 1
    %2803 = vsyncpa [#allocation9], 1
    %s2804 = scalar_lea.sflag [#allocation9], 1
    %2805 = vsyncpa %s2804, 1

</llo_original>
